<compile_context>
chip_gen: v7x
topology: tpu7x:2x2x1
jax: 0.10.0
libtpu: 0.0.40
codegen_flags: <defaults>
</compile_context>

<pallas_src>
import jax
import jax.numpy as jnp
from jax.experimental import pallas as pl
from jax.experimental.pallas import tpu as pltpu


def _round_up(x, m):
    return ((x + m - 1) // m) * m


def _vmem_limit_bytes():
    """Generation-aware scoped-VMEM budget (v5e/v6e: 128 MiB phys, v7x: 64 MiB)."""
    mib = 1024 * 1024
    try:
        phys = pltpu.get_tpu_info().vmem_capacity_bytes
    except Exception:                      # info unavailable -> conservative default
        phys = 64 * mib
    return int(max(min(phys - 32 * mib, 96 * mib), 32 * mib))


# ----------------------------------------------------------------------------
# Fused BasicBlock kernel: one grid step == one image.
# ----------------------------------------------------------------------------
def _make_block_kernel(stride, Ho, Wo, Cin, Cmid, Cp, n_x):
    M = Ho * Wo

    def kernel(*args):
        x_refs = args[:n_x]
        w1_ref, b1_ref, w2_ref, b2_ref, o_ref, y1p_ref = args[n_x:]

        # ---- conv1 (3x3, stride) taps straight from the halo'd VMEM tile ----
        def x_tap(kh, kw):
            if stride == 1:
                return x_refs[0][0, kh:kh + Ho, kw:kw + Wo, :]
            # stride 2: parity-split padded input -> every tap is a contiguous
            # slice of one of the four (row-parity x col-parity) sub-images.
            sub = x_refs[2 * (kh % 2) + (kw % 2)]
            return sub[0, kh // 2:kh // 2 + Ho, kw // 2:kw // 2 + Wo, :]

        t1 = jnp.concatenate(
            [x_tap(kh, kw) for kh in range(3) for kw in range(3)],
            axis=-1).reshape(M, 9 * Cin)
        y1 = jnp.dot(t1, w1_ref[...], preferred_element_type=jnp.float32)
        y1 = jnp.maximum(y1 + b1_ref[...], 0.0)          # folded BN1 shift + ReLU

        # ---- stage y1 (zero-padded spatially) in VMEM for conv2's taps ----
        y1p_ref[...] = jnp.zeros(y1p_ref.shape, y1p_ref.dtype)
        y1p_ref[1:Ho + 1, 1:Wo + 1, :] = (
            y1.reshape(Ho, Wo, Cmid).astype(y1p_ref.dtype))

        # ---- residual input chunk (bf16), no extra HBM tensor needed ----
        if stride == 1:
            xs = x_refs[0][0, 1:1 + Ho, 1:1 + Wo, :]      # interior == original x
        else:
            xs = x_refs[3][0, 0:Ho, 0:Wo, :]              # odd/odd parity == strided x

        # ---- conv2 (3x3, s=1) + residual in ONE combined MXU matmul ----
        chunks = [y1p_ref[kh:kh + Ho, kw:kw + Wo, :]
                  for kh in range(3) for kw in range(3)] + [xs]
        t2 = jnp.concatenate(chunks, axis=-1).reshape(M, 9 * Cmid + Cin)
        y2 = jnp.dot(t2, w2_ref[...], preferred_element_type=jnp.float32)
        y2 = jnp.maximum(y2 + b2_ref[...], 0.0)           # shifts + final ReLU
        o_ref[0] = y2.astype(o_ref.dtype)

    return kernel


# ----------------------------------------------------------------------------
# Wrapper: weight/BN folding, activation prep (single cheap pass), pallas_call.
# ----------------------------------------------------------------------------
def basic_block_forward(x_nhwc, params, *, stride, out_dtype=jnp.float32):
    # out_dtype=jnp.bfloat16 halves output writeback (useful on v5e); f32 kept
    # here to match the PyTorch module's output dtype.
    N, H, W, Cin = x_nhwc.shape
    Cout = params["w1"].shape[-1]          # planes
    Cmid = Cout                            # conv1 out channels (conv2 K side, UNpadded)
    Cp = _round_up(Cout, 128)              # lane-dense store width
    Ho = (H - 1) // stride + 1
    Wo = (W - 1) // stride + 1
    M = Ho * Wo
    use_downsample = (stride != 1) or (Cin != Cout)
    eps = 1e-5

    # ---- fold eval-mode BN into the weight columns + a per-channel shift ----
    def fold(bn):
        gamma, beta, mean, var = bn
        s = gamma / jnp.sqrt(var + eps)
        return s, beta - mean * s

    s1, b1 = fold(params["bn1"])
    s2, b2 = fold(params["bn2"])

    w1 = (params["w1"].reshape(9 * Cin, Cmid) * s1[None, :]).astype(jnp.bfloat16)
    w2 = params["w2"].reshape(9 * Cmid, Cout) * s2[None, :]
    if use_downsample:
        sd, bd = fold(params["bnd"])
        bottom = params["wd"].reshape(Cin, Cout) * sd[None, :]   # 1x1 conv * BN scale
        shift2 = b2 + bd
    else:
        bottom = jnp.eye(Cin, Cout, dtype=jnp.float32)           # identity rides the MXU
        shift2 = b2
    w2c = jnp.pad(jnp.concatenate([w2, bottom], axis=0),
                  ((0, 0), (0, Cp - Cout))).astype(jnp.bfloat16)  # (9*Cmid+Cin, Cp)
    b1 = b1.reshape(1, Cmid).astype(jnp.float32)
    b2c = jnp.pad(shift2, (0, Cp - Cout)).reshape(1, Cp).astype(jnp.float32)

    # ---- activation prep: a single cheap pass (pad; parity-split if strided).
    #      All 9x tap replication happens inside the kernel, in VMEM.       ----
    xpad = jnp.pad(x_nhwc.astype(jnp.bfloat16), ((0, 0), (1, 1), (1, 1), (0, 0)))
    if stride == 1:
        x_inputs = [xpad]
    elif stride == 2:
        x_inputs = [xpad[:, rp::2, cp::2, :] for rp in (0, 1) for cp in (0, 1)]
    else:
        raise NotImplementedError("BasicBlock Pallas kernel supports stride 1 or 2")

    kernel = _make_block_kernel(stride, Ho, Wo, Cin, Cmid, Cp, len(x_inputs))

    in_specs = [pl.BlockSpec((1,) + xi.shape[1:], lambda n: (n, 0, 0, 0))
                for xi in x_inputs]
    # Weights / shifts are resident blocks (constant index_map); once BN is
    # folded they are small.  (On v7x, pipeline_mode=pl.Buffered(1) on these
    # specs would drop the redundant second buffer.)
    in_specs += [
        pl.BlockSpec(w1.shape, lambda n: (0, 0)),
        pl.BlockSpec(b1.shape, lambda n: (0, 0)),
        pl.BlockSpec(w2c.shape, lambda n: (0, 0)),
        pl.BlockSpec(b2c.shape, lambda n: (0, 0)),
    ]

    def nbytes(a):
        return a.size * a.dtype.itemsize

    flops = 2 * N * M * (9 * Cin * Cmid + (9 * Cmid + Cin) * Cp)
    bytes_accessed = (sum(nbytes(a) for a in x_inputs)
                      + nbytes(w1) + nbytes(w2c) + nbytes(b1) + nbytes(b2c)
                      + N * M * Cp * jnp.dtype(out_dtype).itemsize)

    out = pl.pallas_call(
        kernel,
        out_shape=jax.ShapeDtypeStruct((N, M, Cp), out_dtype),
        grid=(N,),
        in_specs=in_specs,
        out_specs=pl.BlockSpec((1, M, Cp), lambda n: (n, 0, 0)),
        scratch_shapes=[pltpu.VMEM((Ho + 2, Wo + 2, Cmid), jnp.bfloat16)],
        compiler_params=pltpu.CompilerParams(
            dimension_semantics=("parallel",),        # batch images across v7x TCs
            vmem_limit_bytes=_vmem_limit_bytes()),
        cost_estimate=pl.CostEstimate(flops=int(flops), transcendentals=0,
                                      bytes_accessed=int(bytes_accessed)),
    )(*x_inputs, w1, b1, w2c, b2c)

    out = out.reshape(N, Ho, Wo, Cp)
    if Cp != Cout:
        # TODO(synk): in a full network keep the lane-padded layout and fold this
        # slice into the next block's tap extraction (it is skipped when Cp==Cout).
        out = out[..., :Cout]
    return out


# ----------------------------------------------------------------------------
# Parameter init and a pure-JAX f32 reference (eval-mode BN).
# ----------------------------------------------------------------------------
def init_params(key, inplanes, planes):
    k1, k2, k3, kb1, kb2, kbd = jax.random.split(key, 6)

    def bn_init(k, c):
        kg, kb, km, kv = jax.random.split(k, 4)
        gamma = 1.0 + 0.1 * jax.random.normal(kg, (c,), jnp.float32)
        beta = 0.1 * jax.random.normal(kb, (c,), jnp.float32)
        mean = 0.1 * jax.random.normal(km, (c,), jnp.float32)
        var = 1.0 + 0.1 * jnp.abs(jax.random.normal(kv, (c,), jnp.float32))
        return (gamma, beta, mean, var)

    return {
        "w1": jax.random.normal(k1, (3, 3, inplanes, planes), jnp.float32)
        / jnp.sqrt(9.0 * inplanes),
        "w2": jax.random.normal(k2, (3, 3, planes, planes), jnp.float32)
        / jnp.sqrt(9.0 * planes),
        "wd": jax.random.normal(k3, (1, 1, inplanes, planes), jnp.float32)
        / jnp.sqrt(1.0 * inplanes),
        "bn1": bn_init(kb1, planes),
        "bn2": bn_init(kb2, planes),
        "bnd": bn_init(kbd, planes),
    }


def _conv_ref(x, w, stride, pad):
    return jax.lax.conv_general_dilated(
        x, w, window_strides=(stride, stride),
        padding=((pad, pad), (pad, pad)),
        dimension_numbers=("NHWC", "HWIO", "NHWC"))


def basic_block_ref(x, params, stride, use_downsample, eps=1e-5):
    def bn(y, p):
        gamma, beta, mean, var = p
        return (y - mean) / jnp.sqrt(var + eps) * gamma + beta

    y = jax.nn.relu(bn(_conv_ref(x, params["w1"], stride, 1), params["bn1"]))
    y = bn(_conv_ref(y, params["w2"], 1, 1), params["bn2"])
    res = x
    if use_downsample:
        res = bn(_conv_ref(x, params["wd"], stride, 0), params["bnd"])
    return jax.nn.relu(y + res)


# ----------------------------------------------------------------------------
if __name__ == "__main__":
    key = jax.random.PRNGKey(0)
    fwd = jax.jit(basic_block_forward, static_argnames=("stride",))

    configs = [
        # (N, inplanes, planes, H, W, stride)
        (2, 4, 8, 16, 16, 2),   # downsample path (stride 2 + channel change)
        (2, 8, 8, 16, 16, 1),   # identity-residual path
    ]
    out = None
    for idx, (N, cin, cout, H, W, stride) in enumerate(configs):
        kx, kp, key = jax.random.split(key, 3)
        x_nchw = jax.random.normal(kx, (N, cin, H, W), jnp.float32)  # PyTorch layout
        x_nhwc = jnp.transpose(x_nchw, (0, 2, 3, 1))                 # kernel layout
        params = init_params(kp, cin, cout)
        use_downsample = (stride != 1) or (cin != cout)

        out = jax.block_until_ready(fwd(x_nhwc, params, stride=stride))

        ref = basic_block_ref(x_nhwc, params, stride, use_downsample)
        assert out.shape == ref.shape, (out.shape, ref.shape)
        max_err = float(jnp.max(jnp.abs(out - ref)))
        # bf16 MXU inputs with f32 accumulation vs the f32 reference.
        assert jnp.allclose(out, ref, atol=3e-2, rtol=3e-2), \
            f"config {idx}: max_err={max_err}"

    # NCHW output, matching the PyTorch module's convention, if needed:
    _ = jnp.transpose(out, (0, 3, 1, 2))

    print("KERNEL_OK")
</pallas_src>

<mosaic_0001>
module attributes {stable_mosaic.version = 11 : i64} {
  func.func @kernel(%arg0: i32, %arg1: memref<1x9x9x4xbf16, #tpu.memory_space<vmem>>, %arg2: memref<1x9x9x4xbf16, #tpu.memory_space<vmem>>, %arg3: memref<1x9x9x4xbf16, #tpu.memory_space<vmem>>, %arg4: memref<1x9x9x4xbf16, #tpu.memory_space<vmem>>, %arg5: memref<36x8xbf16, #tpu.memory_space<vmem>>, %arg6: memref<1x8xf32, #tpu.memory_space<vmem>>, %arg7: memref<76x128xbf16, #tpu.memory_space<vmem>>, %arg8: memref<1x128xf32, #tpu.memory_space<vmem>>, %arg9: memref<1x64x128xf32, #tpu.memory_space<vmem>>, %arg10: memref<10x10x8xbf16, #tpu.memory_space<vmem>>) attributes {dimension_semantics = [#tpu.dimension_semantics<parallel>], iteration_bounds = array<i64: 2>, scalar_prefetch = 0 : i64, scratch_operands = 1 : i64, tpu.core_type = #tpu.core_type<tc>, window_params = [{transform_indices = @transform_0, window_bounds = array<i64: 1, 9, 9, 4>}, {transform_indices = @transform_1, window_bounds = array<i64: 1, 9, 9, 4>}, {transform_indices = @transform_2, window_bounds = array<i64: 1, 9, 9, 4>}, {transform_indices = @transform_3, window_bounds = array<i64: 1, 9, 9, 4>}, {pipeline_mode = #tpu.pipeline_mode<synchronous>, transform_indices = @transform_4, window_bounds = array<i64: 36, 8>}, {pipeline_mode = #tpu.pipeline_mode<synchronous>, transform_indices = @transform_5, window_bounds = array<i64: 1, 8>}, {pipeline_mode = #tpu.pipeline_mode<synchronous>, transform_indices = @transform_6, window_bounds = array<i64: 76, 128>}, {pipeline_mode = #tpu.pipeline_mode<synchronous>, transform_indices = @transform_7, window_bounds = array<i64: 1, 128>}, {transform_indices = @transform_8, window_bounds = array<i64: 1, 64, 128>}]} {
    %c0 = arith.constant 0 : index
    %c0_0 = arith.constant 0 : index
    %c0_1 = arith.constant 0 : index
    %c0_2 = arith.constant 0 : index
    %0 = vector.load %arg1[%c0, %c0_0, %c0_1, %c0_2] : memref<1x9x9x4xbf16, #tpu.memory_space<vmem>>, vector<1x8x8x4xbf16>
    %1 = vector.shape_cast %0 : vector<1x8x8x4xbf16> to vector<8x8x4xbf16>
    %c0_3 = arith.constant 0 : index
    %c0_4 = arith.constant 0 : index
    %c0_5 = arith.constant 0 : index
    %c0_6 = arith.constant 0 : index
    %2 = vector.load %arg2[%c0_3, %c0_4, %c0_5, %c0_6] : memref<1x9x9x4xbf16, #tpu.memory_space<vmem>>, vector<1x8x8x4xbf16>
    %3 = vector.shape_cast %2 : vector<1x8x8x4xbf16> to vector<8x8x4xbf16>
    %c0_7 = arith.constant 0 : index
    %c0_8 = arith.constant 0 : index
    %c1 = arith.constant 1 : index
    %c0_9 = arith.constant 0 : index
    %4 = vector.load %arg1[%c0_7, %c0_8, %c1, %c0_9] : memref<1x9x9x4xbf16, #tpu.memory_space<vmem>>, vector<1x8x8x4xbf16>
    %5 = vector.shape_cast %4 : vector<1x8x8x4xbf16> to vector<8x8x4xbf16>
    %c0_10 = arith.constant 0 : index
    %c0_11 = arith.constant 0 : index
    %c0_12 = arith.constant 0 : index
    %c0_13 = arith.constant 0 : index
    %6 = vector.load %arg3[%c0_10, %c0_11, %c0_12, %c0_13] : memref<1x9x9x4xbf16, #tpu.memory_space<vmem>>, vector<1x8x8x4xbf16>
    %7 = vector.shape_cast %6 : vector<1x8x8x4xbf16> to vector<8x8x4xbf16>
    %c0_14 = arith.constant 0 : index
    %c0_15 = arith.constant 0 : index
    %c0_16 = arith.constant 0 : index
    %c0_17 = arith.constant 0 : index
    %8 = vector.load %arg4[%c0_14, %c0_15, %c0_16, %c0_17] : memref<1x9x9x4xbf16, #tpu.memory_space<vmem>>, vector<1x8x8x4xbf16>
    %9 = vector.shape_cast %8 : vector<1x8x8x4xbf16> to vector<8x8x4xbf16>
    %c0_18 = arith.constant 0 : index
    %c0_19 = arith.constant 0 : index
    %c1_20 = arith.constant 1 : index
    %c0_21 = arith.constant 0 : index
    %10 = vector.load %arg3[%c0_18, %c0_19, %c1_20, %c0_21] : memref<1x9x9x4xbf16, #tpu.memory_space<vmem>>, vector<1x8x8x4xbf16>
    %11 = vector.shape_cast %10 : vector<1x8x8x4xbf16> to vector<8x8x4xbf16>
    %c0_22 = arith.constant 0 : index
    %c1_23 = arith.constant 1 : index
    %c0_24 = arith.constant 0 : index
    %c0_25 = arith.constant 0 : index
    %12 = vector.load %arg1[%c0_22, %c1_23, %c0_24, %c0_25] : memref<1x9x9x4xbf16, #tpu.memory_space<vmem>>, vector<1x8x8x4xbf16>
    %13 = vector.shape_cast %12 : vector<1x8x8x4xbf16> to vector<8x8x4xbf16>
    %c0_26 = arith.constant 0 : index
    %c1_27 = arith.constant 1 : index
    %c0_28 = arith.constant 0 : index
    %c0_29 = arith.constant 0 : index
    %14 = vector.load %arg2[%c0_26, %c1_27, %c0_28, %c0_29] : memref<1x9x9x4xbf16, #tpu.memory_space<vmem>>, vector<1x8x8x4xbf16>
    %15 = vector.shape_cast %14 : vector<1x8x8x4xbf16> to vector<8x8x4xbf16>
    %c0_30 = arith.constant 0 : index
    %c1_31 = arith.constant 1 : index
    %c1_32 = arith.constant 1 : index
    %c0_33 = arith.constant 0 : index
    %16 = vector.load %arg1[%c0_30, %c1_31, %c1_32, %c0_33] : memref<1x9x9x4xbf16, #tpu.memory_space<vmem>>, vector<1x8x8x4xbf16>
    %17 = vector.shape_cast %16 : vector<1x8x8x4xbf16> to vector<8x8x4xbf16>
    %18 = tpu.concatenate %1, %3, %5, %7, %9, %11, %13, %15, %17 in 2 : vector<8x8x4xbf16>, vector<8x8x4xbf16>, vector<8x8x4xbf16>, vector<8x8x4xbf16>, vector<8x8x4xbf16>, vector<8x8x4xbf16>, vector<8x8x4xbf16>, vector<8x8x4xbf16>, vector<8x8x4xbf16> -> vector<8x8x36xbf16>
    %19 = vector.shape_cast %18 : vector<8x8x36xbf16> to vector<64x36xbf16>
    %c0_34 = arith.constant 0 : index
    %c0_35 = arith.constant 0 : index
    %20 = vector.load %arg5[%c0_34, %c0_35] : memref<36x8xbf16, #tpu.memory_space<vmem>>, vector<36x8xbf16>
    %cst = arith.constant dense<0.000000e+00> : vector<64x8xf32>
    %21 = tpu.matmul %19, %20, %cst {dimension_numbers = #tpu.dot_dimension_numbers<[1], [0], [0], [1], [0, 0, 1, 1], [], []>} : vector<64x36xbf16>, vector<36x8xbf16>, vector<64x8xf32> -> vector<64x8xf32>
    %c0_36 = arith.constant 0 : index
    %c0_37 = arith.constant 0 : index
    %22 = vector.load %arg6[%c0_36, %c0_37] : memref<1x8xf32, #tpu.memory_space<vmem>>, vector<1x8xf32>
    %23 = vector.broadcast %22 : vector<1x8xf32> to vector<64x8xf32>
    %24 = arith.addf %21, %23 : vector<64x8xf32>
    %cst_38 = arith.constant 0.000000e+00 : f32
    %25 = vector.broadcast %cst_38 : f32 to vector<64x8xf32>
    %26 = arith.maximumf %24, %25 : vector<64x8xf32>
    %cst_39 = arith.constant 0.000000e+00 : bf16
    %27 = vector.broadcast %cst_39 : bf16 to vector<10x10x8xbf16>
    %c0_40 = arith.constant 0 : index
    %c0_41 = arith.constant 0 : index
    %c0_42 = arith.constant 0 : index
    %28 = vector.load %arg10[%c0_40, %c0_41, %c0_42] : memref<10x10x8xbf16, #tpu.memory_space<vmem>>, vector<10x10x8xbf16>
    tpu.vector_store %arg10[%c0_40, %c0_41, %c0_42], %27 {strides = array<i32>} : memref<10x10x8xbf16, #tpu.memory_space<vmem>>, vector<10x10x8xbf16>,
    %29 = vector.shape_cast %26 : vector<64x8xf32> to vector<8x8x8xf32>
    %30 = arith.truncf %29 : vector<8x8x8xf32> to vector<8x8x8xbf16>
    %c1_43 = arith.constant 1 : index
    %c1_44 = arith.constant 1 : index
    %c0_45 = arith.constant 0 : index
    %31 = vector.load %arg10[%c1_43, %c1_44, %c0_45] : memref<10x10x8xbf16, #tpu.memory_space<vmem>>, vector<8x8x8xbf16>
    tpu.vector_store %arg10[%c1_43, %c1_44, %c0_45], %30 {strides = array<i32>} : memref<10x10x8xbf16, #tpu.memory_space<vmem>>, vector<8x8x8xbf16>,
    %c0_46 = arith.constant 0 : index
    %c0_47 = arith.constant 0 : index
    %c0_48 = arith.constant 0 : index
    %c0_49 = arith.constant 0 : index
    %32 = vector.load %arg4[%c0_46, %c0_47, %c0_48, %c0_49] : memref<1x9x9x4xbf16, #tpu.memory_space<vmem>>, vector<1x8x8x4xbf16>
    %33 = vector.shape_cast %32 : vector<1x8x8x4xbf16> to vector<8x8x4xbf16>
    %c0_50 = arith.constant 0 : index
    %c0_51 = arith.constant 0 : index
    %c0_52 = arith.constant 0 : index
    %34 = vector.load %arg10[%c0_50, %c0_51, %c0_52] : memref<10x10x8xbf16, #tpu.memory_space<vmem>>, vector<8x8x8xbf16>
    %c0_53 = arith.constant 0 : index
    %c1_54 = arith.constant 1 : index
    %c0_55 = arith.constant 0 : index
    %35 = vector.load %arg10[%c0_53, %c1_54, %c0_55] : memref<10x10x8xbf16, #tpu.memory_space<vmem>>, vector<8x8x8xbf16>
    %c0_56 = arith.constant 0 : index
    %c2 = arith.constant 2 : index
    %c0_57 = arith.constant 0 : index
    %36 = vector.load %arg10[%c0_56, %c2, %c0_57] : memref<10x10x8xbf16, #tpu.memory_space<vmem>>, vector<8x8x8xbf16>
    %c1_58 = arith.constant 1 : index
    %c0_59 = arith.constant 0 : index
    %c0_60 = arith.constant 0 : index
    %37 = vector.load %arg10[%c1_58, %c0_59, %c0_60] : memref<10x10x8xbf16, #tpu.memory_space<vmem>>, vector<8x8x8xbf16>
    %c1_61 = arith.constant 1 : index
    %c1_62 = arith.constant 1 : index
    %c0_63 = arith.constant 0 : index
    %38 = vector.load %arg10[%c1_61, %c1_62, %c0_63] : memref<10x10x8xbf16, #tpu.memory_space<vmem>>, vector<8x8x8xbf16>
    %c1_64 = arith.constant 1 : index
    %c2_65 = arith.constant 2 : index
    %c0_66 = arith.constant 0 : index
    %39 = vector.load %arg10[%c1_64, %c2_65, %c0_66] : memref<10x10x8xbf16, #tpu.memory_space<vmem>>, vector<8x8x8xbf16>
    %c2_67 = arith.constant 2 : index
    %c0_68 = arith.constant 0 : index
    %c0_69 = arith.constant 0 : index
    %40 = vector.load %arg10[%c2_67, %c0_68, %c0_69] : memref<10x10x8xbf16, #tpu.memory_space<vmem>>, vector<8x8x8xbf16>
    %c2_70 = arith.constant 2 : index
    %c1_71 = arith.constant 1 : index
    %c0_72 = arith.constant 0 : index
    %41 = vector.load %arg10[%c2_70, %c1_71, %c0_72] : memref<10x10x8xbf16, #tpu.memory_space<vmem>>, vector<8x8x8xbf16>
    %c2_73 = arith.constant 2 : index
    %c2_74 = arith.constant 2 : index
    %c0_75 = arith.constant 0 : index
    %42 = vector.load %arg10[%c2_73, %c2_74, %c0_75] : memref<10x10x8xbf16, #tpu.memory_space<vmem>>, vector<8x8x8xbf16>
    %43 = tpu.concatenate %34, %35, %36, %37, %38, %39, %40, %41, %42, %33 in 2 : vector<8x8x8xbf16>, vector<8x8x8xbf16>, vector<8x8x8xbf16>, vector<8x8x8xbf16>, vector<8x8x8xbf16>, vector<8x8x8xbf16>, vector<8x8x8xbf16>, vector<8x8x8xbf16>, vector<8x8x8xbf16>, vector<8x8x4xbf16> -> vector<8x8x76xbf16>
    %44 = vector.shape_cast %43 : vector<8x8x76xbf16> to vector<64x76xbf16>
    %c0_76 = arith.constant 0 : index
    %c0_77 = arith.constant 0 : index
    %45 = vector.load %arg7[%c0_76, %c0_77] : memref<76x128xbf16, #tpu.memory_space<vmem>>, vector<76x128xbf16>
    %cst_78 = arith.constant dense<0.000000e+00> : vector<64x128xf32>
    %46 = tpu.matmul %44, %45, %cst_78 {dimension_numbers = #tpu.dot_dimension_numbers<[1], [0], [0], [1], [0, 0, 1, 1], [], []>} : vector<64x76xbf16>, vector<76x128xbf16>, vector<64x128xf32> -> vector<64x128xf32>
    %c0_79 = arith.constant 0 : index
    %c0_80 = arith.constant 0 : index
    %47 = vector.load %arg8[%c0_79, %c0_80] : memref<1x128xf32, #tpu.memory_space<vmem>>, vector<1x128xf32>
    %48 = vector.broadcast %47 : vector<1x128xf32> to vector<64x128xf32>
    %49 = arith.addf %46, %48 : vector<64x128xf32>
    %cst_81 = arith.constant 0.000000e+00 : f32
    %50 = vector.broadcast %cst_81 : f32 to vector<64x128xf32>
    %51 = arith.maximumf %49, %50 : vector<64x128xf32>
    %c0_82 = arith.constant 0 : index
    %c0_83 = arith.constant 0 : index
    %c0_84 = arith.constant 0 : index
    %52 = vector.load %arg9[%c0_82, %c0_83, %c0_84] : memref<1x64x128xf32, #tpu.memory_space<vmem>>, vector<1x64x128xf32>
    %53 = vector.shape_cast %52 : vector<1x64x128xf32> to vector<64x128xf32>
    %54 = vector.shape_cast %51 : vector<64x128xf32> to vector<1x64x128xf32>
    tpu.vector_store %arg9[%c0_82, %c0_83, %c0_84], %54 {strides = array<i32>} : memref<1x64x128xf32, #tpu.memory_space<vmem>>, vector<1x64x128xf32>,
    return
  }
  func.func @transform_0(%arg0: i32) -> (i32, i32, i32, i32) {
    %c0_i32 = arith.constant 0 : i32
    %c0_i32_0 = arith.constant 0 : i32
    %c0_i32_1 = arith.constant 0 : i32
    %c0_i32_2 = arith.constant 0 : i32
    return %arg0, %c0_i32, %c0_i32_0, %c0_i32_1 : i32, i32, i32, i32
  }
  func.func @transform_1(%arg0: i32) -> (i32, i32, i32, i32) {
    %c0_i32 = arith.constant 0 : i32
    %c0_i32_0 = arith.constant 0 : i32
    %c0_i32_1 = arith.constant 0 : i32
    %c0_i32_2 = arith.constant 0 : i32
    return %arg0, %c0_i32, %c0_i32_0, %c0_i32_1 : i32, i32, i32, i32
  }
  func.func @transform_2(%arg0: i32) -> (i32, i32, i32, i32) {
    %c0_i32 = arith.constant 0 : i32
    %c0_i32_0 = arith.constant 0 : i32
    %c0_i32_1 = arith.constant 0 : i32
    %c0_i32_2 = arith.constant 0 : i32
    return %arg0, %c0_i32, %c0_i32_0, %c0_i32_1 : i32, i32, i32, i32
  }
  func.func @transform_3(%arg0: i32) -> (i32, i32, i32, i32) {
    %c0_i32 = arith.constant 0 : i32
    %c0_i32_0 = arith.constant 0 : i32
    %c0_i32_1 = arith.constant 0 : i32
    %c0_i32_2 = arith.constant 0 : i32
    return %arg0, %c0_i32, %c0_i32_0, %c0_i32_1 : i32, i32, i32, i32
  }
  func.func @transform_4(%arg0: i32) -> (i32, i32) {
    %c0_i32 = arith.constant 0 : i32
    %c0_i32_0 = arith.constant 0 : i32
    %c0_i32_1 = arith.constant 0 : i32
    return %c0_i32, %c0_i32_0 : i32, i32
  }
  func.func @transform_5(%arg0: i32) -> (i32, i32) {
    %c0_i32 = arith.constant 0 : i32
    %c0_i32_0 = arith.constant 0 : i32
    %c0_i32_1 = arith.constant 0 : i32
    return %c0_i32, %c0_i32_0 : i32, i32
  }
  func.func @transform_6(%arg0: i32) -> (i32, i32) {
    %c0_i32 = arith.constant 0 : i32
    %c0_i32_0 = arith.constant 0 : i32
    %c0_i32_1 = arith.constant 0 : i32
    return %c0_i32, %c0_i32_0 : i32, i32
  }
  func.func @transform_7(%arg0: i32) -> (i32, i32) {
    %c0_i32 = arith.constant 0 : i32
    %c0_i32_0 = arith.constant 0 : i32
    %c0_i32_1 = arith.constant 0 : i32
    return %c0_i32, %c0_i32_0 : i32, i32
  }
  func.func @transform_8(%arg0: i32) -> (i32, i32, i32) {
    %c0_i32 = arith.constant 0 : i32
    %c0_i32_0 = arith.constant 0 : i32
    %c0_i32_1 = arith.constant 0 : i32
    return %arg0, %c0_i32, %c0_i32_0 : i32, i32, i32
  }
}

</mosaic_0001>

<llo_original>
// kernel: basic_block_forward.1
$region0: #{basic_block_forward.1}
  #allocation0 [shape = 'u32[]', space=smem, size = 0x4, offset = 0x4, fixed_abs, tag = 'smem constant byte address 0x4 - core index']
  #allocation1 [shape = 'u32[144,128]{1,0:T(1,128)}', space=vmem, size = 0x12000, scoped, tag = 'internal scratch']
  #allocation2 [shape = 'bf16[10,10,8]{2,1,0:T(8,128)(2,1)}', space=vmem, size = 0xa000, scoped, tag = 'scratch operand']
  %s0 = inlined_call_operand.vmem [shape: bf16[2,9,9,4], index: 0, kind: input, shape index: {}]
  %s1 = inlined_call_operand.vmem [shape: bf16[2,9,9,4], index: 1, kind: input, shape index: {}]
  %s2 = inlined_call_operand.vmem [shape: bf16[2,9,9,4], index: 2, kind: input, shape index: {}]
  %s3 = inlined_call_operand.vmem [shape: bf16[2,9,9,4], index: 3, kind: input, shape index: {}]
  %s4 = inlined_call_operand.vmem [shape: bf16[36,8], index: 4, kind: input, shape index: {}]
  %s5 = inlined_call_operand.vmem [shape: f32[1,8], index: 5, kind: input, shape index: {}]
  %s6 = inlined_call_operand.vmem [shape: bf16[76,128], index: 6, kind: input, shape index: {}]
  %s7 = inlined_call_operand.vmem [shape: f32[1,128], index: 7, kind: input, shape index: {}]
  %s8 = inlined_call_operand.hbm [shape: f32[2,64,128], index: 8, kind: output, shape index: {}]
  %s9 = sld [smem:[#allocation0]]
  $region65: #{basic_block_forward.1} parent=0
    _
  %s11 = ssub.s32 1, %s9
  %s12 = scalar_select 0, %s11, %s9
  $region1: #{basic_block_forward.1} parent=0
    #allocation3 [shape = 'u8[65536]{0}', space=vmem, size = 0x10000, scoped, tag = 'output window, operand 0']
    #allocation4 [shape = 's32[2]{0}', space=sflag, size = 0x8, scoped, tag = 'scoped memory for basic_block_forward.1']
    %13 = vsyncpa [#allocation4], 0
    %s14 = scalar_lea.sflag [#allocation4], 1
    %15 = vsyncpa %s14, 0
    loop: start=0, step=1, limit=4
    $region2: #{basic_block_forward.1} parent=1 // loop_pre_header
      _
    $region3: #{basic_block_forward.1} parent=1 // loop_header
      %s17 = sphi 0, %s21
      %p18 = scmp.ge.s32.totalorder %s17, 4
      %s27 = sphi 0, %s29
      %s30 = sphi 0, %s27
      %s31 = sphi 0, %s30
      %s47 = sphi 0, %s31
      %s53 = sphi 0, %s55
      %s56 = sphi 0, %s53
      %s57 = sphi 0, %s56
      %s73 = sphi 0, %s57
      %s79 = sphi 0, %s81
      %s82 = sphi 0, %s79
      %s83 = sphi 0, %s82
      %s99 = sphi 0, %s83
      %s105 = sphi 0, %s107
      %s108 = sphi 0, %s105
      %s109 = sphi 0, %s108
      %s125 = sphi 0, %s109
      %s129 = sphi 0, %s129
      %s131 = sphi 0, %s129
      %s132 = sphi 0, %s131
      %s146 = sphi 0, %s132
      %s150 = sphi 0, %s150
      %s152 = sphi 0, %s150
      %s153 = sphi 0, %s152
      %s167 = sphi 0, %s153
      %s171 = sphi 0, %s171
      %s173 = sphi 0, %s171
      %s174 = sphi 0, %s173
      %s188 = sphi 0, %s174
      %s192 = sphi 0, %s192
      %s194 = sphi 0, %s192
      %s195 = sphi 0, %s194
      %s209 = sphi 0, %s195
      %s215 = sphi 0, %s217
      %s218 = sphi 0, %s215
      %s219 = sphi 0, %s218
      %s235 = sphi 0, %s219
    $region4: #{basic_block_forward.1} parent=1 // loop_header_branch
      %20 = sbr.rel (%p18) target = $region8
    $region5: #{basic_block_forward.1} parent=1 // loop_body
      %s22 = ssub.s32 %s17, 1
      %s23 = ssub.s32 %s17, 2
      %s24 = sadd.s32 %s17, 1
      %s25 = ssub.s32 %s17, %s24
      %p26 = scmp.eq.s32.totalorder %s25, 0
      %s28 = sadd.s32 %s27, 1
      %s29 = scalar_select %p26, %s27, %s28
      %p32 = pneg %p26
      %p33 = scmp.eq.s32.totalorder %s17, 1
      %p34 = por %p32, %p33
      %p35 = scmp.ne.s32.totalorder %s27, %s30
      %p36 = scmp.eq.s32.totalorder %s17, 0
      %p37 = por %p35, %p36
      %p38 = scmp.ne.s32.totalorder %s27, %s30
      %p39 = scmp.eq.s32.totalorder %s22, 1
      %p40 = por %p38, %p39
      %p41 = scmp.ne.s32.totalorder %s30, %s31
      %p42 = scmp.eq.s32.totalorder %s22, 0
      %p43 = por %p41, %p42
      %p44 = scmp.ne.s32.totalorder %s30, %s31
      %p45 = scmp.eq.s32.totalorder %s23, 1
      %p46 = por %p44, %p45
      %p48 = scmp.ne.s32.totalorder %s31, %s47
      %p49 = scmp.eq.s32.totalorder %s23, 0
      %p50 = por %p48, %p49
      %s51 = ssub.s32 %s17, %s24
      %p52 = scmp.eq.s32.totalorder %s51, 0
      %s54 = sadd.s32 %s53, 1
      %s55 = scalar_select %p52, %s53, %s54
      %p58 = pneg %p52
      %p59 = scmp.eq.s32.totalorder %s17, 1
      %p60 = por %p58, %p59
      %p61 = scmp.ne.s32.totalorder %s53, %s56
      %p62 = scmp.eq.s32.totalorder %s17, 0
      %p63 = por %p61, %p62
      %p64 = scmp.ne.s32.totalorder %s53, %s56
      %p65 = scmp.eq.s32.totalorder %s22, 1
      %p66 = por %p64, %p65
      %p67 = scmp.ne.s32.totalorder %s56, %s57
      %p68 = scmp.eq.s32.totalorder %s22, 0
      %p69 = por %p67, %p68
      %p70 = scmp.ne.s32.totalorder %s56, %s57
      %p71 = scmp.eq.s32.totalorder %s23, 1
      %p72 = por %p70, %p71
      %p74 = scmp.ne.s32.totalorder %s57, %s73
      %p75 = scmp.eq.s32.totalorder %s23, 0
      %p76 = por %p74, %p75
      %s77 = ssub.s32 %s17, %s24
      %p78 = scmp.eq.s32.totalorder %s77, 0
      %s80 = sadd.s32 %s79, 1
      %s81 = scalar_select %p78, %s79, %s80
      %p84 = pneg %p78
      %p85 = scmp.eq.s32.totalorder %s17, 1
      %p86 = por %p84, %p85
      %p87 = scmp.ne.s32.totalorder %s79, %s82
      %p88 = scmp.eq.s32.totalorder %s17, 0
      %p89 = por %p87, %p88
      %p90 = scmp.ne.s32.totalorder %s79, %s82
      %p91 = scmp.eq.s32.totalorder %s22, 1
      %p92 = por %p90, %p91
      %p93 = scmp.ne.s32.totalorder %s82, %s83
      %p94 = scmp.eq.s32.totalorder %s22, 0
      %p95 = por %p93, %p94
      %p96 = scmp.ne.s32.totalorder %s82, %s83
      %p97 = scmp.eq.s32.totalorder %s23, 1
      %p98 = por %p96, %p97
      %p100 = scmp.ne.s32.totalorder %s83, %s99
      %p101 = scmp.eq.s32.totalorder %s23, 0
      %p102 = por %p100, %p101
      %s103 = ssub.s32 %s17, %s24
      %p104 = scmp.eq.s32.totalorder %s103, 0
      %s106 = sadd.s32 %s105, 1
      %s107 = scalar_select %p104, %s105, %s106
      %p110 = pneg %p104
      %p111 = scmp.eq.s32.totalorder %s17, 1
      %p112 = por %p110, %p111
      %p113 = scmp.ne.s32.totalorder %s105, %s108
      %p114 = scmp.eq.s32.totalorder %s17, 0
      %p115 = por %p113, %p114
      %p116 = scmp.ne.s32.totalorder %s105, %s108
      %p117 = scmp.eq.s32.totalorder %s22, 1
      %p118 = por %p116, %p117
      %p119 = scmp.ne.s32.totalorder %s108, %s109
      %p120 = scmp.eq.s32.totalorder %s22, 0
      %p121 = por %p119, %p120
      %p122 = scmp.ne.s32.totalorder %s108, %s109
      %p123 = scmp.eq.s32.totalorder %s23, 1
      %p124 = por %p122, %p123
      %p126 = scmp.ne.s32.totalorder %s109, %s125
      %p127 = scmp.eq.s32.totalorder %s23, 0
      %p128 = por %p126, %p127
      %s130 = sadd.s32 %s129, 1
      %p133 = scmp.eq.s32.totalorder %s17, 1
      %p134 = scmp.ne.s32.totalorder %s129, %s131
      %p135 = scmp.eq.s32.totalorder %s17, 0
      %p136 = por %p134, %p135
      %p137 = scmp.ne.s32.totalorder %s129, %s131
      %p138 = scmp.eq.s32.totalorder %s22, 1
      %p139 = por %p137, %p138
      %p140 = scmp.ne.s32.totalorder %s131, %s132
      %p141 = scmp.eq.s32.totalorder %s22, 0
      %p142 = por %p140, %p141
      %p143 = scmp.ne.s32.totalorder %s131, %s132
      %p144 = scmp.eq.s32.totalorder %s23, 1
      %p145 = por %p143, %p144
      %p147 = scmp.ne.s32.totalorder %s132, %s146
      %p148 = scmp.eq.s32.totalorder %s23, 0
      %p149 = por %p147, %p148
      %s151 = sadd.s32 %s150, 1
      %p154 = scmp.eq.s32.totalorder %s17, 1
      %p155 = scmp.ne.s32.totalorder %s150, %s152
      %p156 = scmp.eq.s32.totalorder %s17, 0
      %p157 = por %p155, %p156
      %p158 = scmp.ne.s32.totalorder %s150, %s152
      %p159 = scmp.eq.s32.totalorder %s22, 1
      %p160 = por %p158, %p159
      %p161 = scmp.ne.s32.totalorder %s152, %s153
      %p162 = scmp.eq.s32.totalorder %s22, 0
      %p163 = por %p161, %p162
      %p164 = scmp.ne.s32.totalorder %s152, %s153
      %p165 = scmp.eq.s32.totalorder %s23, 1
      %p166 = por %p164, %p165
      %p168 = scmp.ne.s32.totalorder %s153, %s167
      %p169 = scmp.eq.s32.totalorder %s23, 0
      %p170 = por %p168, %p169
      %s172 = sadd.s32 %s171, 1
      %p175 = scmp.eq.s32.totalorder %s17, 1
      %p176 = scmp.ne.s32.totalorder %s171, %s173
      %p177 = scmp.eq.s32.totalorder %s17, 0
      %p178 = por %p176, %p177
      %p179 = scmp.ne.s32.totalorder %s171, %s173
      %p180 = scmp.eq.s32.totalorder %s22, 1
      %p181 = por %p179, %p180
      %p182 = scmp.ne.s32.totalorder %s173, %s174
      %p183 = scmp.eq.s32.totalorder %s22, 0
      %p184 = por %p182, %p183
      %p185 = scmp.ne.s32.totalorder %s173, %s174
      %p186 = scmp.eq.s32.totalorder %s23, 1
      %p187 = por %p185, %p186
      %p189 = scmp.ne.s32.totalorder %s174, %s188
      %p190 = scmp.eq.s32.totalorder %s23, 0
      %p191 = por %p189, %p190
      %s193 = sadd.s32 %s192, 1
      %p196 = scmp.eq.s32.totalorder %s17, 1
      %p197 = scmp.ne.s32.totalorder %s192, %s194
      %p198 = scmp.eq.s32.totalorder %s17, 0
      %p199 = por %p197, %p198
      %p200 = scmp.ne.s32.totalorder %s192, %s194
      %p201 = scmp.eq.s32.totalorder %s22, 1
      %p202 = por %p200, %p201
      %p203 = scmp.ne.s32.totalorder %s194, %s195
      %p204 = scmp.eq.s32.totalorder %s22, 0
      %p205 = por %p203, %p204
      %p206 = scmp.ne.s32.totalorder %s194, %s195
      %p207 = scmp.eq.s32.totalorder %s23, 1
      %p208 = por %p206, %p207
      %p210 = scmp.ne.s32.totalorder %s195, %s209
      %p211 = scmp.eq.s32.totalorder %s23, 0
      %p212 = por %p210, %p211
      %s213 = ssub.s32 %s17, %s24
      %p214 = scmp.eq.s32.totalorder %s213, 0
      %s216 = sadd.s32 %s215, 1
      %s217 = scalar_select %p214, %s215, %s216
      %p220 = pneg %p214
      %p221 = scmp.eq.s32.totalorder %s17, 1
      %p222 = por %p220, %p221
      %p223 = scmp.ne.s32.totalorder %s215, %s218
      %p224 = scmp.eq.s32.totalorder %s17, 0
      %p225 = por %p223, %p224
      %p226 = scmp.ne.s32.totalorder %s215, %s218
      %p227 = scmp.eq.s32.totalorder %s22, 1
      %p228 = por %p226, %p227
      %p229 = scmp.ne.s32.totalorder %s218, %s219
      %p230 = scmp.eq.s32.totalorder %s22, 0
      %p231 = por %p229, %p230
      %p232 = scmp.ne.s32.totalorder %s218, %s219
      %p233 = scmp.eq.s32.totalorder %s23, 1
      %p234 = por %p232, %p233
      %p236 = scmp.ne.s32.totalorder %s219, %s235
      %p237 = scmp.eq.s32.totalorder %s23, 0
      %p238 = por %p236, %p237
      %p239 = scmp.le.s32.totalorder 1, %s17
      %p240 = scmp.lt.s32.totalorder %s17, 3
      %p241 = pnand %p239, %p240
      %p242 = pneg %p241
      // Predicated region
      $region9: #{basic_block_forward.1} parent=5 // pred_check
        _
      $region10: #{basic_block_forward.1} parent=5 // pred_check_branch
        %244 = sbr.rel (%p241) target = $region12
      $region11: #{basic_block_forward.1} parent=5 // pred_region
        %s245 = ssub.s32 %s17, 1
        // Predicated region
        $region13: #{basic_block_forward.1} parent=11 // pred_check
          %p246 = pneg %p142
        $region14: #{basic_block_forward.1} parent=11 // pred_check_branch
          %248 = sbr.rel (%p246) target = $region16
        $region15: #{basic_block_forward.1} parent=11 // pred_region
          _
        $region16: #{basic_block_forward.1} parent=11 // pred_fallthru
          _
        // Predicated region
        $region17: #{basic_block_forward.1} parent=11 // pred_check
          %p249 = pneg %p163
        $region18: #{basic_block_forward.1} parent=11 // pred_check_branch
          %251 = sbr.rel (%p249) target = $region20
        $region19: #{basic_block_forward.1} parent=11 // pred_region
          _
        $region20: #{basic_block_forward.1} parent=11 // pred_fallthru
          _
        // Predicated region
        $region21: #{basic_block_forward.1} parent=11 // pred_check
          %p252 = pneg %p184
        $region22: #{basic_block_forward.1} parent=11 // pred_check_branch
          %254 = sbr.rel (%p252) target = $region24
        $region23: #{basic_block_forward.1} parent=11 // pred_region
          _
        $region24: #{basic_block_forward.1} parent=11 // pred_fallthru
          _
        // Predicated region
        $region25: #{basic_block_forward.1} parent=11 // pred_check
          %p255 = pneg %p205
        $region26: #{basic_block_forward.1} parent=11 // pred_check_branch
          %257 = sbr.rel (%p255) target = $region28
        $region27: #{basic_block_forward.1} parent=11 // pred_region
          _
        $region28: #{basic_block_forward.1} parent=11 // pred_fallthru
          _
      $region12: #{basic_block_forward.1} parent=5 // pred_fallthru
        _
      %p258 = scmp.lt.s32.totalorder %s17, 2
      // Predicated region
      $region29: #{basic_block_forward.1} parent=5 // pred_check
        %p259 = pneg %p258
      $region30: #{basic_block_forward.1} parent=5 // pred_check_branch
        %261 = sbr.rel (%p259) target = $region32
      $region31: #{basic_block_forward.1} parent=5 // pred_region
        // Predicated region
        $region33: #{basic_block_forward.1} parent=31 // pred_check
          %p262 = pneg %p37
        $region34: #{basic_block_forward.1} parent=31 // pred_check_branch
          %264 = sbr.rel (%p262) target = $region36
        $region35: #{basic_block_forward.1} parent=31 // pred_region
          %p265 = scmp.lt.s32.totalorder %s17, 1
          %s266 = scalar_select %p265, %s17, 1
          %s267 = smul.addr %s266, 18
          %s268 = smul.addr %s267, 4
          %s269 = scalar_lea.vmem %s0, %s268
        $region36: #{basic_block_forward.1} parent=31 // pred_fallthru
          _
        // Predicated region
        $region37: #{basic_block_forward.1} parent=31 // pred_check
          %p270 = pneg %p63
        $region38: #{basic_block_forward.1} parent=31 // pred_check_branch
          %272 = sbr.rel (%p270) target = $region40
        $region39: #{basic_block_forward.1} parent=31 // pred_region
          %p273 = scmp.lt.s32.totalorder %s17, 1
          %s274 = scalar_select %p273, %s17, 1
          %s275 = smul.addr %s274, 18
          %s276 = smul.addr %s275, 4
          %s277 = scalar_lea.vmem %s1, %s276
        $region40: #{basic_block_forward.1} parent=31 // pred_fallthru
          _
        // Predicated region
        $region41: #{basic_block_forward.1} parent=31 // pred_check
          %p278 = pneg %p89
        $region42: #{basic_block_forward.1} parent=31 // pred_check_branch
          %280 = sbr.rel (%p278) target = $region44
        $region43: #{basic_block_forward.1} parent=31 // pred_region
          %p281 = scmp.lt.s32.totalorder %s17, 1
          %s282 = scalar_select %p281, %s17, 1
          %s283 = smul.addr %s282, 18
          %s284 = smul.addr %s283, 4
          %s285 = scalar_lea.vmem %s2, %s284
        $region44: #{basic_block_forward.1} parent=31 // pred_fallthru
          _
        // Predicated region
        $region45: #{basic_block_forward.1} parent=31 // pred_check
          %p286 = pneg %p115
        $region46: #{basic_block_forward.1} parent=31 // pred_check_branch
          %288 = sbr.rel (%p286) target = $region48
        $region47: #{basic_block_forward.1} parent=31 // pred_region
          %p289 = scmp.lt.s32.totalorder %s17, 1
          %s290 = scalar_select %p289, %s17, 1
          %s291 = smul.addr %s290, 18
          %s292 = smul.addr %s291, 4
          %s293 = scalar_lea.vmem %s3, %s292
        $region48: #{basic_block_forward.1} parent=31 // pred_fallthru
          _
      $region32: #{basic_block_forward.1} parent=5 // pred_fallthru
        _
      %p294 = scmp.le.s32.totalorder 1, %s17
      %p295 = scmp.lt.s32.totalorder %s17, 3
      %p296 = pnand %p294, %p295
      %p297 = pneg %p296
      // Predicated region
      $region49: #{basic_block_forward.1} parent=5 // pred_check
        _
      $region50: #{basic_block_forward.1} parent=5 // pred_check_branch
        %299 = sbr.rel (%p296) target = $region52
      $region51: #{basic_block_forward.1} parent=5 // pred_region
        %s300 = ssub.s32 %s17, 1
        %p301 = scmp.lt.s32.totalorder %s22, 1
        %s302 = scalar_select %p301, %s22, 1
        %s303 = smul.addr %s302, 18
        %s304 = smul.addr %s303, 4
        %s305 = scalar_lea.vmem %s0, %s304
        %p306 = pneg %p43
        %p307 = pneg %p40
        %p308 = scmp.lt.s32.totalorder %s22, 1
        %s309 = scalar_select %p308, %s22, 1
        %s310 = smul.addr %s309, 18
        %s311 = smul.addr %s310, 4
        %s312 = scalar_lea.vmem %s1, %s311
        %p313 = pneg %p69
        %p314 = pneg %p66
        %p315 = scmp.lt.s32.totalorder %s22, 1
        %s316 = scalar_select %p315, %s22, 1
        %s317 = smul.addr %s316, 18
        %s318 = smul.addr %s317, 4
        %s319 = scalar_lea.vmem %s2, %s318
        %p320 = pneg %p95
        %p321 = pneg %p92
        %p322 = scmp.lt.s32.totalorder %s22, 1
        %s323 = scalar_select %p322, %s22, 1
        %s324 = smul.addr %s323, 18
        %s325 = smul.addr %s324, 4
        %s326 = scalar_lea.vmem %s3, %s325
        %p327 = pneg %p121
        %p328 = pneg %p118
        %p329 = pneg %p142
        %p330 = pneg %p139
        %p331 = pneg %p163
        %p332 = pneg %p160
        %p333 = pneg %p184
        %p334 = pneg %p181
        %p335 = pneg %p205
        %p336 = pneg %p202
        %p337 = pneg %p231
        %p338 = pneg %p228
        %s339 = sand.u32 %s218, 1
        %s340 = scalar_lea.sflag [#allocation4], %s339
        %s341 = sand.u32 %s218, 1
        %s342 = smul.addr %s341, 64
        %s343 = scalar_lea.vmem [#allocation3], %s342
        %p344 = scmp.lt.s32.totalorder %s22, 1
        %s345 = scalar_select %p344, %s22, 1
        %s346 = smul.addr %s345, 18
        %s347 = smul.addr %s346, 4
        %s348 = scalar_lea.vmem %s0, %s347
        %p349 = scmp.lt.s32.totalorder %s22, 1
        %s350 = scalar_select %p349, %s22, 1
        %s351 = smul.addr %s350, 18
        %s352 = smul.addr %s351, 4
        %s353 = scalar_lea.vmem %s1, %s352
        %p354 = scmp.lt.s32.totalorder %s22, 1
        %s355 = scalar_select %p354, %s22, 1
        %s356 = smul.addr %s355, 18
        %s357 = smul.addr %s356, 4
        %s358 = scalar_lea.vmem %s2, %s357
        %p359 = scmp.lt.s32.totalorder %s22, 1
        %s360 = scalar_select %p359, %s22, 1
        %s361 = smul.addr %s360, 18
        %s362 = smul.addr %s361, 4
        %s363 = scalar_lea.vmem %s3, %s362
        %v365 = vld [vmem:[%s348] sm:$0xf]
        %v366 = vld [vmem:[%s348 + $0x8] sm:$0xf]
        %v367 = vld [vmem:[%s348 + $0x10] sm:$0xf]
        %v368 = vld [vmem:[%s348 + $0x18] sm:$0xf]
        %v369 = vld [vmem:[%s348 + $0x20] sm:$0xf]
        %v370 = vld [vmem:[%s348 + $0x28] sm:$0xf]
        %v371 = vld [vmem:[%s348 + $0x30] sm:$0xf]
        %v372 = vld [vmem:[%s348 + $0x38] sm:$0xf]
        %v373 = vld [vmem:[%s353] sm:$0xf]
        %v374 = vld [vmem:[%s353 + $0x8] sm:$0xf]
        %v375 = vld [vmem:[%s353 + $0x10] sm:$0xf]
        %v376 = vld [vmem:[%s353 + $0x18] sm:$0xf]
        %v377 = vld [vmem:[%s353 + $0x20] sm:$0xf]
        %v378 = vld [vmem:[%s353 + $0x28] sm:$0xf]
        %v379 = vld [vmem:[%s353 + $0x30] sm:$0xf]
        %v380 = vld [vmem:[%s353 + $0x38] sm:$0xf]
        %v381 = vld [vmem:[%s348 + $0x4] sm:$0x1]
        %v382 = vld [vmem:[%s348 + $0xc] sm:$0x1]
        %v383 = vld [vmem:[%s348 + $0x14] sm:$0x1]
        %v384 = vld [vmem:[%s348 + $0x1c] sm:$0x1]
        %v385 = vld [vmem:[%s348 + $0x24] sm:$0x1]
        %v386 = vld [vmem:[%s348 + $0x2c] sm:$0x1]
        %v387 = vld [vmem:[%s348 + $0x34] sm:$0x1]
        %v388 = vld [vmem:[%s348 + $0x3c] sm:$0x1]
        %v389 = vld [vmem:[%s358] sm:$0xf]
        %v390 = vld [vmem:[%s358 + $0x8] sm:$0xf]
        %v391 = vld [vmem:[%s358 + $0x10] sm:$0xf]
        %v392 = vld [vmem:[%s358 + $0x18] sm:$0xf]
        %v393 = vld [vmem:[%s358 + $0x20] sm:$0xf]
        %v394 = vld [vmem:[%s358 + $0x28] sm:$0xf]
        %v395 = vld [vmem:[%s358 + $0x30] sm:$0xf]
        %v396 = vld [vmem:[%s358 + $0x38] sm:$0xf]
        %v397 = vld [vmem:[%s363] sm:$0xf]
        %v398 = vld [vmem:[%s363 + $0x8] sm:$0xf]
        %v399 = vld [vmem:[%s363 + $0x10] sm:$0xf]
        %v400 = vld [vmem:[%s363 + $0x18] sm:$0xf]
        %v401 = vld [vmem:[%s363 + $0x20] sm:$0xf]
        %v402 = vld [vmem:[%s363 + $0x28] sm:$0xf]
        %v403 = vld [vmem:[%s363 + $0x30] sm:$0xf]
        %v404 = vld [vmem:[%s363 + $0x38] sm:$0xf]
        %v405 = vld [vmem:[%s358 + $0x4] sm:$0x1]
        %v406 = vld [vmem:[%s358 + $0xc] sm:$0x1]
        %v407 = vld [vmem:[%s358 + $0x14] sm:$0x1]
        %v408 = vld [vmem:[%s358 + $0x1c] sm:$0x1]
        %v409 = vld [vmem:[%s358 + $0x24] sm:$0x1]
        %v410 = vld [vmem:[%s358 + $0x2c] sm:$0x1]
        %v411 = vld [vmem:[%s358 + $0x34] sm:$0x1]
        %v412 = vld [vmem:[%s358 + $0x3c] sm:$0x1]
        %s413 = scalar_lea.vmem %s348, 8
        %v414 = vld [vmem:[%s413] sm:$0xf]
        %v415 = vld [vmem:[%s413 + $0x8] sm:$0xf]
        %v416 = vld [vmem:[%s413 + $0x10] sm:$0xf]
        %v417 = vld [vmem:[%s413 + $0x18] sm:$0xf]
        %v418 = vld [vmem:[%s413 + $0x20] sm:$0xf]
        %v419 = vld [vmem:[%s413 + $0x28] sm:$0xf]
        %v420 = vld [vmem:[%s413 + $0x30] sm:$0xf]
        %v421 = vld [vmem:[%s413 + $0x38] sm:$0xf]
        %s422 = scalar_lea.vmem %s353, 8
        %v423 = vld [vmem:[%s422] sm:$0xf]
        %v424 = vld [vmem:[%s422 + $0x8] sm:$0xf]
        %v425 = vld [vmem:[%s422 + $0x10] sm:$0xf]
        %v426 = vld [vmem:[%s422 + $0x18] sm:$0xf]
        %v427 = vld [vmem:[%s422 + $0x20] sm:$0xf]
        %v428 = vld [vmem:[%s422 + $0x28] sm:$0xf]
        %v429 = vld [vmem:[%s422 + $0x30] sm:$0xf]
        %v430 = vld [vmem:[%s422 + $0x38] sm:$0xf]
        %v431 = vld [vmem:[%s413 + $0x4] sm:$0x1]
        %v432 = vld [vmem:[%s413 + $0xc] sm:$0x1]
        %v433 = vld [vmem:[%s413 + $0x14] sm:$0x1]
        %v434 = vld [vmem:[%s413 + $0x1c] sm:$0x1]
        %v435 = vld [vmem:[%s413 + $0x24] sm:$0x1]
        %v436 = vld [vmem:[%s413 + $0x2c] sm:$0x1]
        %v437 = vld [vmem:[%s413 + $0x34] sm:$0x1]
        %v438 = vld [vmem:[%s413 + $0x3c] sm:$0x1]
        %v447 = vunpack.c.l.b16 %v373
        %v448 = vunpack.c.l.b16 %v374
        %v449 = vunpack.c.l.b16 %v375
        %v450 = vunpack.c.l.b16 %v376
        %v451 = vunpack.c.l.b16 %v377
        %v452 = vunpack.c.l.b16 %v378
        %v453 = vunpack.c.l.b16 %v379
        %v454 = vunpack.c.l.b16 %v380
        %v455 = vpack.c.b16 %v447, %v447
        %v456 = vpack.c.b16 %v448, %v448
        %v457 = vpack.c.b16 %v449, %v449
        %v458 = vpack.c.b16 %v450, %v450
        %v459 = vpack.c.b16 %v451, %v451
        %v460 = vpack.c.b16 %v452, %v452
        %v461 = vpack.c.b16 %v453, %v453
        %v462 = vpack.c.b16 %v454, %v454
        %463 = vrot.lane.b32.xlu0 %v455, 4
        %v464 = vpop.permute.xlu0 %463
        %465 = vrot.lane.b32.xlu0 %v456, 4
        %v466 = vpop.permute.xlu0 %465
        %467 = vrot.lane.b32.xlu0 %v457, 4
        %v468 = vpop.permute.xlu0 %467
        %469 = vrot.lane.b32.xlu0 %v458, 4
        %v470 = vpop.permute.xlu0 %469
        %471 = vrot.lane.b32.xlu0 %v459, 4
        %v472 = vpop.permute.xlu0 %471
        %473 = vrot.lane.b32.xlu0 %v460, 4
        %v474 = vpop.permute.xlu0 %473
        %475 = vrot.lane.b32.xlu0 %v461, 4
        %v476 = vpop.permute.xlu0 %475
        %477 = vrot.lane.b32.xlu0 %v462, 4
        %v478 = vpop.permute.xlu0 %477
        %v495 = vunpack.c.l.b16 %v365
        %v496 = vunpack.c.l.b16 %v381
        %v497 = vunpack.c.l.b16 %v366
        %v498 = vunpack.c.l.b16 %v382
        %v499 = vunpack.c.l.b16 %v367
        %v500 = vunpack.c.l.b16 %v383
        %v501 = vunpack.c.l.b16 %v368
        %v502 = vunpack.c.l.b16 %v384
        %v503 = vunpack.c.l.b16 %v369
        %v504 = vunpack.c.l.b16 %v385
        %v505 = vunpack.c.l.b16 %v370
        %v506 = vunpack.c.l.b16 %v386
        %v507 = vunpack.c.l.b16 %v371
        %v508 = vunpack.c.l.b16 %v387
        %v509 = vunpack.c.l.b16 %v372
        %v510 = vunpack.c.l.b16 %v388
        %v511 = vpack.c.b16 %v496, %v495
        %v512 = vpack.c.b16 %v498, %v497
        %v513 = vpack.c.b16 %v500, %v499
        %v514 = vpack.c.b16 %v502, %v501
        %v515 = vpack.c.b16 %v504, %v503
        %v516 = vpack.c.b16 %v506, %v505
        %v517 = vpack.c.b16 %v508, %v507
        %v518 = vpack.c.b16 %v510, %v509
        %v520 = vshrl.u32 %v511, 16
        %v522 = vshll.u32 %v511, 16
        %v524 = vrot.slane %v522, 1
        %v525 = vor.u32 %v520, %v524
        %v527 = vshrl.u32 %v512, 16
        %v529 = vshll.u32 %v512, 16
        %v531 = vrot.slane %v529, 1
        %v532 = vor.u32 %v527, %v531
        %v534 = vshrl.u32 %v513, 16
        %v536 = vshll.u32 %v513, 16
        %v538 = vrot.slane %v536, 1
        %v539 = vor.u32 %v534, %v538
        %v541 = vshrl.u32 %v514, 16
        %v543 = vshll.u32 %v514, 16
        %v545 = vrot.slane %v543, 1
        %v546 = vor.u32 %v541, %v545
        %v548 = vshrl.u32 %v515, 16
        %v550 = vshll.u32 %v515, 16
        %v552 = vrot.slane %v550, 1
        %v553 = vor.u32 %v548, %v552
        %v555 = vshrl.u32 %v516, 16
        %v557 = vshll.u32 %v516, 16
        %v559 = vrot.slane %v557, 1
        %v560 = vor.u32 %v555, %v559
        %v562 = vshrl.u32 %v517, 16
        %v564 = vshll.u32 %v517, 16
        %v566 = vrot.slane %v564, 1
        %v567 = vor.u32 %v562, %v566
        %v569 = vshrl.u32 %v518, 16
        %v571 = vshll.u32 %v518, 16
        %v573 = vrot.slane %v571, 1
        %v574 = vor.u32 %v569, %v573
        %575 = vrot.lane.b32.xlu0 %v525, 8
        %v576 = vpop.permute.xlu0 %575
        %577 = vrot.lane.b32.xlu0 %v532, 8
        %v578 = vpop.permute.xlu0 %577
        %579 = vrot.lane.b32.xlu0 %v539, 8
        %v580 = vpop.permute.xlu0 %579
        %581 = vrot.lane.b32.xlu0 %v546, 8
        %v582 = vpop.permute.xlu0 %581
        %583 = vrot.lane.b32.xlu0 %v553, 8
        %v584 = vpop.permute.xlu0 %583
        %585 = vrot.lane.b32.xlu0 %v560, 8
        %v586 = vpop.permute.xlu0 %585
        %587 = vrot.lane.b32.xlu0 %v567, 8
        %v588 = vpop.permute.xlu0 %587
        %589 = vrot.lane.b32.xlu0 %v574, 8
        %v590 = vpop.permute.xlu0 %589
        %v599 = vunpack.c.l.b16 %v389
        %v600 = vunpack.c.l.b16 %v390
        %v601 = vunpack.c.l.b16 %v391
        %v602 = vunpack.c.l.b16 %v392
        %v603 = vunpack.c.l.b16 %v393
        %v604 = vunpack.c.l.b16 %v394
        %v605 = vunpack.c.l.b16 %v395
        %v606 = vunpack.c.l.b16 %v396
        %v607 = vpack.c.b16 %v599, %v599
        %v608 = vpack.c.b16 %v600, %v600
        %v609 = vpack.c.b16 %v601, %v601
        %v610 = vpack.c.b16 %v602, %v602
        %v611 = vpack.c.b16 %v603, %v603
        %v612 = vpack.c.b16 %v604, %v604
        %v613 = vpack.c.b16 %v605, %v605
        %v614 = vpack.c.b16 %v606, %v606
        %615 = vrot.lane.b32.xlu0 %v607, 12
        %v616 = vpop.permute.xlu0 %615
        %617 = vrot.lane.b32.xlu0 %v608, 12
        %v618 = vpop.permute.xlu0 %617
        %619 = vrot.lane.b32.xlu0 %v609, 12
        %v620 = vpop.permute.xlu0 %619
        %621 = vrot.lane.b32.xlu0 %v610, 12
        %v622 = vpop.permute.xlu0 %621
        %623 = vrot.lane.b32.xlu0 %v611, 12
        %v624 = vpop.permute.xlu0 %623
        %625 = vrot.lane.b32.xlu0 %v612, 12
        %v626 = vpop.permute.xlu0 %625
        %627 = vrot.lane.b32.xlu0 %v613, 12
        %v628 = vpop.permute.xlu0 %627
        %629 = vrot.lane.b32.xlu0 %v614, 12
        %v630 = vpop.permute.xlu0 %629
        %v639 = vunpack.c.l.b16 %v397
        %v640 = vunpack.c.l.b16 %v398
        %v641 = vunpack.c.l.b16 %v399
        %v642 = vunpack.c.l.b16 %v400
        %v643 = vunpack.c.l.b16 %v401
        %v644 = vunpack.c.l.b16 %v402
        %v645 = vunpack.c.l.b16 %v403
        %v646 = vunpack.c.l.b16 %v404
        %v647 = vpack.c.b16 %v639, %v639
        %v648 = vpack.c.b16 %v640, %v640
        %v649 = vpack.c.b16 %v641, %v641
        %v650 = vpack.c.b16 %v642, %v642
        %v651 = vpack.c.b16 %v643, %v643
        %v652 = vpack.c.b16 %v644, %v644
        %v653 = vpack.c.b16 %v645, %v645
        %v654 = vpack.c.b16 %v646, %v646
        %655 = vrot.lane.b32.xlu0 %v647, 16
        %v656 = vpop.permute.xlu0 %655
        %657 = vrot.lane.b32.xlu0 %v648, 16
        %v658 = vpop.permute.xlu0 %657
        %659 = vrot.lane.b32.xlu0 %v649, 16
        %v660 = vpop.permute.xlu0 %659
        %661 = vrot.lane.b32.xlu0 %v650, 16
        %v662 = vpop.permute.xlu0 %661
        %663 = vrot.lane.b32.xlu0 %v651, 16
        %v664 = vpop.permute.xlu0 %663
        %665 = vrot.lane.b32.xlu0 %v652, 16
        %v666 = vpop.permute.xlu0 %665
        %667 = vrot.lane.b32.xlu0 %v653, 16
        %v668 = vpop.permute.xlu0 %667
        %669 = vrot.lane.b32.xlu0 %v654, 16
        %v670 = vpop.permute.xlu0 %669
        %v679 = vunpack.c.l.b16 %v405
        %v680 = vunpack.c.l.b16 %v406
        %v681 = vunpack.c.l.b16 %v407
        %v682 = vunpack.c.l.b16 %v408
        %v683 = vunpack.c.l.b16 %v409
        %v684 = vunpack.c.l.b16 %v410
        %v685 = vunpack.c.l.b16 %v411
        %v686 = vunpack.c.l.b16 %v412
        %v687 = vpack.c.b16 %v679, %v599
        %v688 = vpack.c.b16 %v680, %v600
        %v689 = vpack.c.b16 %v681, %v601
        %v690 = vpack.c.b16 %v682, %v602
        %v691 = vpack.c.b16 %v683, %v603
        %v692 = vpack.c.b16 %v684, %v604
        %v693 = vpack.c.b16 %v685, %v605
        %v694 = vpack.c.b16 %v686, %v606
        %v696 = vshrl.u32 %v687, 16
        %v698 = vshll.u32 %v687, 16
        %v700 = vrot.slane %v698, 1
        %v701 = vor.u32 %v696, %v700
        %v703 = vshrl.u32 %v688, 16
        %v705 = vshll.u32 %v688, 16
        %v707 = vrot.slane %v705, 1
        %v708 = vor.u32 %v703, %v707
        %v710 = vshrl.u32 %v689, 16
        %v712 = vshll.u32 %v689, 16
        %v714 = vrot.slane %v712, 1
        %v715 = vor.u32 %v710, %v714
        %v717 = vshrl.u32 %v690, 16
        %v719 = vshll.u32 %v690, 16
        %v721 = vrot.slane %v719, 1
        %v722 = vor.u32 %v717, %v721
        %v724 = vshrl.u32 %v691, 16
        %v726 = vshll.u32 %v691, 16
        %v728 = vrot.slane %v726, 1
        %v729 = vor.u32 %v724, %v728
        %v731 = vshrl.u32 %v692, 16
        %v733 = vshll.u32 %v692, 16
        %v735 = vrot.slane %v733, 1
        %v736 = vor.u32 %v731, %v735
        %v738 = vshrl.u32 %v693, 16
        %v740 = vshll.u32 %v693, 16
        %v742 = vrot.slane %v740, 1
        %v743 = vor.u32 %v738, %v742
        %v745 = vshrl.u32 %v694, 16
        %v747 = vshll.u32 %v694, 16
        %v749 = vrot.slane %v747, 1
        %v750 = vor.u32 %v745, %v749
        %751 = vrot.lane.b32.xlu0 %v701, 20
        %v752 = vpop.permute.xlu0 %751
        %753 = vrot.lane.b32.xlu0 %v708, 20
        %v754 = vpop.permute.xlu0 %753
        %755 = vrot.lane.b32.xlu0 %v715, 20
        %v756 = vpop.permute.xlu0 %755
        %757 = vrot.lane.b32.xlu0 %v722, 20
        %v758 = vpop.permute.xlu0 %757
        %759 = vrot.lane.b32.xlu0 %v729, 20
        %v760 = vpop.permute.xlu0 %759
        %761 = vrot.lane.b32.xlu0 %v736, 20
        %v762 = vpop.permute.xlu0 %761
        %763 = vrot.lane.b32.xlu0 %v743, 20
        %v764 = vpop.permute.xlu0 %763
        %765 = vrot.lane.b32.xlu0 %v750, 20
        %v766 = vpop.permute.xlu0 %765
        %v775 = vunpack.c.l.b16 %v414
        %v776 = vunpack.c.l.b16 %v415
        %v777 = vunpack.c.l.b16 %v416
        %v778 = vunpack.c.l.b16 %v417
        %v779 = vunpack.c.l.b16 %v418
        %v780 = vunpack.c.l.b16 %v419
        %v781 = vunpack.c.l.b16 %v420
        %v782 = vunpack.c.l.b16 %v421
        %v783 = vpack.c.b16 %v775, %v775
        %v784 = vpack.c.b16 %v776, %v776
        %v785 = vpack.c.b16 %v777, %v777
        %v786 = vpack.c.b16 %v778, %v778
        %v787 = vpack.c.b16 %v779, %v779
        %v788 = vpack.c.b16 %v780, %v780
        %v789 = vpack.c.b16 %v781, %v781
        %v790 = vpack.c.b16 %v782, %v782
        %791 = vrot.lane.b32.xlu0 %v783, 24
        %v792 = vpop.permute.xlu0 %791
        %793 = vrot.lane.b32.xlu0 %v784, 24
        %v794 = vpop.permute.xlu0 %793
        %795 = vrot.lane.b32.xlu0 %v785, 24
        %v796 = vpop.permute.xlu0 %795
        %797 = vrot.lane.b32.xlu0 %v786, 24
        %v798 = vpop.permute.xlu0 %797
        %799 = vrot.lane.b32.xlu0 %v787, 24
        %v800 = vpop.permute.xlu0 %799
        %801 = vrot.lane.b32.xlu0 %v788, 24
        %v802 = vpop.permute.xlu0 %801
        %803 = vrot.lane.b32.xlu0 %v789, 24
        %v804 = vpop.permute.xlu0 %803
        %805 = vrot.lane.b32.xlu0 %v790, 24
        %v806 = vpop.permute.xlu0 %805
        %v815 = vunpack.c.l.b16 %v423
        %v816 = vunpack.c.l.b16 %v424
        %v817 = vunpack.c.l.b16 %v425
        %v818 = vunpack.c.l.b16 %v426
        %v819 = vunpack.c.l.b16 %v427
        %v820 = vunpack.c.l.b16 %v428
        %v821 = vunpack.c.l.b16 %v429
        %v822 = vunpack.c.l.b16 %v430
        %v823 = vpack.c.b16 %v815, %v815
        %v824 = vpack.c.b16 %v816, %v816
        %v825 = vpack.c.b16 %v817, %v817
        %v826 = vpack.c.b16 %v818, %v818
        %v827 = vpack.c.b16 %v819, %v819
        %v828 = vpack.c.b16 %v820, %v820
        %v829 = vpack.c.b16 %v821, %v821
        %v830 = vpack.c.b16 %v822, %v822
        %831 = vrot.lane.b32.xlu0 %v823, 28
        %v832 = vpop.permute.xlu0 %831
        %833 = vrot.lane.b32.xlu0 %v824, 28
        %v834 = vpop.permute.xlu0 %833
        %835 = vrot.lane.b32.xlu0 %v825, 28
        %v836 = vpop.permute.xlu0 %835
        %837 = vrot.lane.b32.xlu0 %v826, 28
        %v838 = vpop.permute.xlu0 %837
        %839 = vrot.lane.b32.xlu0 %v827, 28
        %v840 = vpop.permute.xlu0 %839
        %841 = vrot.lane.b32.xlu0 %v828, 28
        %v842 = vpop.permute.xlu0 %841
        %843 = vrot.lane.b32.xlu0 %v829, 28
        %v844 = vpop.permute.xlu0 %843
        %845 = vrot.lane.b32.xlu0 %v830, 28
        %v846 = vpop.permute.xlu0 %845
        %v855 = vunpack.c.l.b16 %v431
        %v856 = vunpack.c.l.b16 %v432
        %v857 = vunpack.c.l.b16 %v433
        %v858 = vunpack.c.l.b16 %v434
        %v859 = vunpack.c.l.b16 %v435
        %v860 = vunpack.c.l.b16 %v436
        %v861 = vunpack.c.l.b16 %v437
        %v862 = vunpack.c.l.b16 %v438
        %v863 = vpack.c.b16 %v855, %v775
        %v864 = vpack.c.b16 %v856, %v776
        %v865 = vpack.c.b16 %v857, %v777
        %v866 = vpack.c.b16 %v858, %v778
        %v867 = vpack.c.b16 %v859, %v779
        %v868 = vpack.c.b16 %v860, %v780
        %v869 = vpack.c.b16 %v861, %v781
        %v870 = vpack.c.b16 %v862, %v782
        %v872 = vshrl.u32 %v863, 16
        %v874 = vshll.u32 %v863, 16
        %v876 = vrot.slane %v874, 1
        %v877 = vor.u32 %v872, %v876
        %v879 = vshrl.u32 %v864, 16
        %v881 = vshll.u32 %v864, 16
        %v883 = vrot.slane %v881, 1
        %v884 = vor.u32 %v879, %v883
        %v886 = vshrl.u32 %v865, 16
        %v888 = vshll.u32 %v865, 16
        %v890 = vrot.slane %v888, 1
        %v891 = vor.u32 %v886, %v890
        %v893 = vshrl.u32 %v866, 16
        %v895 = vshll.u32 %v866, 16
        %v897 = vrot.slane %v895, 1
        %v898 = vor.u32 %v893, %v897
        %v900 = vshrl.u32 %v867, 16
        %v902 = vshll.u32 %v867, 16
        %v904 = vrot.slane %v902, 1
        %v905 = vor.u32 %v900, %v904
        %v907 = vshrl.u32 %v868, 16
        %v909 = vshll.u32 %v868, 16
        %v911 = vrot.slane %v909, 1
        %v912 = vor.u32 %v907, %v911
        %v914 = vshrl.u32 %v869, 16
        %v916 = vshll.u32 %v869, 16
        %v918 = vrot.slane %v916, 1
        %v919 = vor.u32 %v914, %v918
        %v921 = vshrl.u32 %v870, 16
        %v923 = vshll.u32 %v870, 16
        %v925 = vrot.slane %v923, 1
        %v926 = vor.u32 %v921, %v925
        %927 = vrot.lane.b32.xlu0 %v877, 32
        %v928 = vpop.permute.xlu0 %927
        %929 = vrot.lane.b32.xlu0 %v884, 32
        %v930 = vpop.permute.xlu0 %929
        %931 = vrot.lane.b32.xlu0 %v891, 32
        %v932 = vpop.permute.xlu0 %931
        %933 = vrot.lane.b32.xlu0 %v898, 32
        %v934 = vpop.permute.xlu0 %933
        %935 = vrot.lane.b32.xlu0 %v905, 32
        %v936 = vpop.permute.xlu0 %935
        %937 = vrot.lane.b32.xlu0 %v912, 32
        %v938 = vpop.permute.xlu0 %937
        %939 = vrot.lane.b32.xlu0 %v919, 32
        %v940 = vpop.permute.xlu0 %939
        %941 = vrot.lane.b32.xlu0 %v926, 32
        %v942 = vpop.permute.xlu0 %941
        %vm943 = vcmask 31744
        %v946 = vsel %vm943, %v365, %v464
        %v949 = vsel %vm943, %v366, %v466
        %v952 = vsel %vm943, %v367, %v468
        %v955 = vsel %vm943, %v368, %v470
        %v958 = vsel %vm943, %v369, %v472
        %v961 = vsel %vm943, %v370, %v474
        %v964 = vsel %vm943, %v371, %v476
        %v967 = vsel %vm943, %v372, %v478
        %vm968 = vcmask 64512
        %v970 = vsel %vm968, %v946, %v576
        %v972 = vsel %vm968, %v949, %v578
        %v974 = vsel %vm968, %v952, %v580
        %v976 = vsel %vm968, %v955, %v582
        %v978 = vsel %vm968, %v958, %v584
        %v980 = vsel %vm968, %v961, %v586
        %v982 = vsel %vm968, %v964, %v588
        %v984 = vsel %vm968, %v967, %v590
        %vm985 = vcmask 97280
        %v987 = vsel %vm985, %v970, %v616
        %v989 = vsel %vm985, %v972, %v618
        %v991 = vsel %vm985, %v974, %v620
        %v993 = vsel %vm985, %v976, %v622
        %v995 = vsel %vm985, %v978, %v624
        %v997 = vsel %vm985, %v980, %v626
        %v999 = vsel %vm985, %v982, %v628
        %v1001 = vsel %vm985, %v984, %v630
        %vm1002 = vcmask 130048
        %v1004 = vsel %vm1002, %v987, %v656
        %v1006 = vsel %vm1002, %v989, %v658
        %v1008 = vsel %vm1002, %v991, %v660
        %v1010 = vsel %vm1002, %v993, %v662
        %v1012 = vsel %vm1002, %v995, %v664
        %v1014 = vsel %vm1002, %v997, %v666
        %v1016 = vsel %vm1002, %v999, %v668
        %v1018 = vsel %vm1002, %v1001, %v670
        %vm1019 = vcmask 162816
        %v1021 = vsel %vm1019, %v1004, %v752
        %v1023 = vsel %vm1019, %v1006, %v754
        %v1025 = vsel %vm1019, %v1008, %v756
        %v1027 = vsel %vm1019, %v1010, %v758
        %v1029 = vsel %vm1019, %v1012, %v760
        %v1031 = vsel %vm1019, %v1014, %v762
        %v1033 = vsel %vm1019, %v1016, %v764
        %v1035 = vsel %vm1019, %v1018, %v766
        %vm1036 = vcmask 195584
        %v1038 = vsel %vm1036, %v1021, %v792
        %v1040 = vsel %vm1036, %v1023, %v794
        %v1042 = vsel %vm1036, %v1025, %v796
        %v1044 = vsel %vm1036, %v1027, %v798
        %v1046 = vsel %vm1036, %v1029, %v800
        %v1048 = vsel %vm1036, %v1031, %v802
        %v1050 = vsel %vm1036, %v1033, %v804
        %v1052 = vsel %vm1036, %v1035, %v806
        %vm1053 = vcmask 228352
        %v1055 = vsel %vm1053, %v1038, %v832
        %v1057 = vsel %vm1053, %v1040, %v834
        %v1059 = vsel %vm1053, %v1042, %v836
        %v1061 = vsel %vm1053, %v1044, %v838
        %v1063 = vsel %vm1053, %v1046, %v840
        %v1065 = vsel %vm1053, %v1048, %v842
        %v1067 = vsel %vm1053, %v1050, %v844
        %v1069 = vsel %vm1053, %v1052, %v846
        %vm1070 = vcmask 261120
        %v1072 = vsel %vm1070, %v1055, %v928
        %v1074 = vsel %vm1070, %v1057, %v930
        %v1076 = vsel %vm1070, %v1059, %v932
        %v1078 = vsel %vm1070, %v1061, %v934
        %v1080 = vsel %vm1070, %v1063, %v936
        %v1082 = vsel %vm1070, %v1065, %v938
        %v1084 = vsel %vm1070, %v1067, %v940
        %v1086 = vsel %vm1070, %v1069, %v942
        %v1087 = vld [vmem:[%s4] sm:$0xf]
        %v1088 = vld [vmem:[%s4 + $0x4] sm:$0xf]
        %v1089 = vld [vmem:[%s4 + $0x8] sm:$0xf]
        %v1090 = vld [vmem:[%s4 + $0xc] sm:$0xf]
        %v1091 = vld [vmem:[%s4 + $0x10] sm:$0x3]
        %v1092 = vld [vmem:[%s5] sm:$0x1]
        %v1094 = vlaneseq
        %v1095 = vshrl.u32 %v1094, 7
        %v1096 = vsub.s32 0, %v1095
        %v1097 = vrot.slane %v1092, %v1096
        %v1107 = vunpack.c.l.b16 %v1072
        %v1108 = vunpack.c.l.b16 %v1074
        %v1109 = vunpack.c.l.b16 %v1076
        %v1110 = vunpack.c.l.b16 %v1078
        %v1111 = vunpack.c.l.b16 %v1080
        %v1112 = vunpack.c.l.b16 %v1082
        %v1113 = vunpack.c.l.b16 %v1084
        %v1114 = vunpack.c.l.b16 %v1086
        %v1115 = vpack.c.b16 %v1108, %v1107
        %v1116 = vpack.c.b16 %v1110, %v1109
        %v1117 = vpack.c.b16 %v1112, %v1111
        %v1118 = vpack.c.b16 %v1114, %v1113
        %v1124 = vunpack.c.l.b16 %v1087
        %v1125 = vunpack.c.l.b16 %v1088
        %v1126 = vunpack.c.l.b16 %v1089
        %v1127 = vunpack.c.l.b16 %v1090
        %v1128 = vunpack.c.l.b16 %v1091
        %v1129 = vpack.c.b16 %v1125, %v1124
        %v1130 = vpack.c.b16 %v1127, %v1126
        %v1131 = vpack.c.b16 %v1128, %v1128
        %vm1134 = vcmask 293888
        %v1136 = vsel %vm1134, %v1115, 0
        %v1139 = vsel %vm1134, %v1116, 0
        %v1142 = vsel %vm1134, %v1117, 0
        %v1145 = vsel %vm1134, %v1118, 0
        %vm1147 = vcmask 1041408
        %v1149 = vsel %vm1147, %v1131, 0
        %1151 = vmatprep.subr.bf16.mxu0 0
        %1152 = vmatpush1.bf16.msra.mxu0 %v1129
        %1153 = vmatprep.subr.bf16.mxu0 0
        %1154 = vmatpush1.bf16.msra.mxu0 %v1130
        %1155 = vmatprep.subr.bf16.mxu0 0
        %1156 = vmatpush1.bf16.msra.mxu0 %v1149
        %1157 = vmatprep.subr.bf16.mxu0 0
        %1158 = vmatpush1.bf16.msra.mxu0 0
        %1159 = vmatprep.subr.bf16.mxu0 0
        %1160 = vmatpush1.bf16.msra.mxu0 0
        %1161 = vmatprep.subr.bf16.mxu0 0
        %1162 = vmatpush1.bf16.msra.mxu0 0
        %1163 = vmatprep.subr.bf16.mxu0 0
        %1164 = vmatpush1.bf16.msra.mxu0 0
        %1165 = vmatprep.subr.bf16.mxu0 0
        %1166 = vmatpush1.bf16.msra.mxu0 0
        %1167 = vmatprep.subr.bf16.mxu0 0
        %1168 = vmatpush1.bf16.msra.mxu0 0
        %1169 = vmatprep.subr.bf16.mxu0 0
        %1170 = vmatpush1.bf16.msra.mxu0 0
        %1171 = vmatprep.subr.bf16.mxu0 0
        %1172 = vmatpush1.bf16.msra.mxu0 0
        %1173 = vmatprep.subr.bf16.mxu0 0
        %1174 = vmatpush1.bf16.msra.mxu0 0
        %1175 = vmatprep.subr.bf16.mxu0 0
        %1176 = vmatpush1.bf16.msra.mxu0 0
        %1177 = vmatprep.subr.bf16.mxu0 0
        %1178 = vmatpush1.bf16.msra.mxu0 0
        %1179 = vmatprep.subr.bf16.mxu0 0
        %1180 = vmatpush1.bf16.msra.mxu0 0
        %1181 = vmatprep.subr.bf16.mxu0 0
        %1182 = vmatpush1.bf16.msra.mxu0 0
        %1183 = vmatprep.mubr.bf16.mxu0 0
        %1184 = vmatmul.mubr.bf16.gmra.mrb[0].mxu0 %v1136
        %v1185 = vpop.f32.mrb[0].mxu0
        %v1186 = vadd.f32 %v1097, %v1185
        %v1187 = vpop.f32.mrb[0].mxu0
        %v1188 = vpop.f32.mrb[0].mxu0
        %v1189 = vadd.f32 %v1097, %v1188
        %v1190 = vpop.f32.mrb[0].mxu0
        %1191 = vmatprep.mubr.bf16.mxu0 0
        %1192 = vmatmul.mubr.bf16.gmra.mrb[0].mxu0 %v1139
        %v1193 = vpop.f32.mrb[0].mxu0
        %v1194 = vadd.f32 %v1097, %v1193
        %v1195 = vpop.f32.mrb[0].mxu0
        %v1196 = vpop.f32.mrb[0].mxu0
        %v1197 = vadd.f32 %v1097, %v1196
        %v1198 = vpop.f32.mrb[0].mxu0
        %1199 = vmatprep.mubr.bf16.mxu0 0
        %1200 = vmatmul.mubr.bf16.gmra.mrb[0].mxu0 %v1142
        %v1201 = vpop.f32.mrb[0].mxu0
        %v1202 = vadd.f32 %v1097, %v1201
        %v1203 = vpop.f32.mrb[0].mxu0
        %v1204 = vpop.f32.mrb[0].mxu0
        %v1205 = vadd.f32 %v1097, %v1204
        %v1206 = vpop.f32.mrb[0].mxu0
        %1207 = vmatprep.mubr.bf16.mxu0 0
        %1208 = vmatmul.mubr.bf16.gmra.mrb[0].mxu0 %v1145
        %v1209 = vpop.f32.mrb[0].mxu0
        %v1210 = vadd.f32 %v1097, %v1209
        %v1211 = vpop.f32.mrb[0].mxu0
        %v1212 = vpop.f32.mrb[0].mxu0
        %v1213 = vadd.f32 %v1097, %v1212
        %v1214 = vpop.f32.mrb[0].mxu0
        %1215 = vdwg.mxu0
        %v1216 = vmax.f32 %v1186, 0.0
        %v1217 = vmax.f32 %v1189, 0.0
        %v1218 = vmax.f32 %v1194, 0.0
        %v1219 = vmax.f32 %v1197, 0.0
        %v1220 = vmax.f32 %v1202, 0.0
        %v1221 = vmax.f32 %v1205, 0.0
        %v1222 = vmax.f32 %v1210, 0.0
        %v1223 = vmax.f32 %v1213, 0.0
        %vm1224 = vcmask 60416
        %1225 = vst.msk [vmem:[#allocation2] sm:$0xf] %vm1224, 0
        %vm1226 = vcmask 57344
        %1227 = vst.msk [vmem:[#allocation2 + $0x4] sm:$0x1] %vm1226, 0
        %1228 = vst.msk [vmem:[#allocation2 + $0x8] sm:$0xf] %vm1224, 0
        %1229 = vst.msk [vmem:[#allocation2 + $0xc] sm:$0x1] %vm1226, 0
        %1230 = vst.msk [vmem:[#allocation2 + $0x10] sm:$0xf] %vm1224, 0
        %1231 = vst.msk [vmem:[#allocation2 + $0x14] sm:$0x1] %vm1226, 0
        %1232 = vst.msk [vmem:[#allocation2 + $0x18] sm:$0xf] %vm1224, 0
        %1233 = vst.msk [vmem:[#allocation2 + $0x1c] sm:$0x1] %vm1226, 0
        %1234 = vst.msk [vmem:[#allocation2 + $0x20] sm:$0xf] %vm1224, 0
        %1235 = vst.msk [vmem:[#allocation2 + $0x24] sm:$0x1] %vm1226, 0
        %1236 = vst.msk [vmem:[#allocation2 + $0x28] sm:$0xf] %vm1224, 0
        %1237 = vst.msk [vmem:[#allocation2 + $0x2c] sm:$0x1] %vm1226, 0
        %1238 = vst.msk [vmem:[#allocation2 + $0x30] sm:$0xf] %vm1224, 0
        %1239 = vst.msk [vmem:[#allocation2 + $0x34] sm:$0x1] %vm1226, 0
        %1240 = vst.msk [vmem:[#allocation2 + $0x38] sm:$0xf] %vm1224, 0
        %1241 = vst.msk [vmem:[#allocation2 + $0x3c] sm:$0x1] %vm1226, 0
        %1242 = vst.msk [vmem:[#allocation2 + $0x40] sm:$0xf] %vm1224, 0
        %1243 = vst.msk [vmem:[#allocation2 + $0x44] sm:$0x1] %vm1226, 0
        %1244 = vst.msk [vmem:[#allocation2 + $0x48] sm:$0xf] %vm1224, 0
        %1245 = vst.msk [vmem:[#allocation2 + $0x4c] sm:$0x1] %vm1226, 0
        %v1246 = vpack.c.bf16 %v1216, %v1216
        %v1247 = vpack.c.bf16 %v1217, %v1217
        %v1248 = vpack.c.bf16 %v1218, %v1218
        %v1249 = vpack.c.bf16 %v1219, %v1219
        %v1250 = vpack.c.bf16 %v1220, %v1220
        %v1251 = vpack.c.bf16 %v1221, %v1221
        %v1252 = vpack.c.bf16 %v1222, %v1222
        %v1253 = vpack.c.bf16 %v1223, %v1223
        %v1262 = vunpack.c.l.b16 %v1246
        %v1263 = vunpack.c.l.b16 %v1247
        %v1264 = vunpack.c.l.b16 %v1248
        %v1265 = vunpack.c.l.b16 %v1249
        %v1266 = vunpack.c.l.b16 %v1250
        %v1267 = vunpack.c.l.b16 %v1251
        %v1268 = vunpack.c.l.b16 %v1252
        %v1269 = vunpack.c.l.b16 %v1253
        %v1270 = vpack.c.b16 %v1262, %v1262
        %v1271 = vpack.c.b16 %v1263, %v1263
        %v1272 = vpack.c.b16 %v1264, %v1264
        %v1273 = vpack.c.b16 %v1265, %v1265
        %v1274 = vpack.c.b16 %v1266, %v1266
        %v1275 = vpack.c.b16 %v1267, %v1267
        %v1276 = vpack.c.b16 %v1268, %v1268
        %v1277 = vpack.c.b16 %v1269, %v1269
        %v1279 = vshrl.u32 %v1270, 16
        %v1281 = vrot.slane %v1279, 7
        %v1282 = vshll.u32 %v1270, 16
        %v1284 = vor.u32 %v1281, %v1282
        %v1285 = vrot.slane %v1281, 4
        %v1287 = vshrl.u32 %v1271, 16
        %v1289 = vrot.slane %v1287, 7
        %v1290 = vshll.u32 %v1271, 16
        %v1292 = vor.u32 %v1289, %v1290
        %v1293 = vrot.slane %v1289, 4
        %v1295 = vshrl.u32 %v1272, 16
        %v1297 = vrot.slane %v1295, 7
        %v1298 = vshll.u32 %v1272, 16
        %v1300 = vor.u32 %v1297, %v1298
        %v1301 = vrot.slane %v1297, 4
        %v1303 = vshrl.u32 %v1273, 16
        %v1305 = vrot.slane %v1303, 7
        %v1306 = vshll.u32 %v1273, 16
        %v1308 = vor.u32 %v1305, %v1306
        %v1309 = vrot.slane %v1305, 4
        %v1311 = vshrl.u32 %v1274, 16
        %v1313 = vrot.slane %v1311, 7
        %v1314 = vshll.u32 %v1274, 16
        %v1316 = vor.u32 %v1313, %v1314
        %v1317 = vrot.slane %v1313, 4
        %v1319 = vshrl.u32 %v1275, 16
        %v1321 = vrot.slane %v1319, 7
        %v1322 = vshll.u32 %v1275, 16
        %v1324 = vor.u32 %v1321, %v1322
        %v1325 = vrot.slane %v1321, 4
        %v1327 = vshrl.u32 %v1276, 16
        %v1329 = vrot.slane %v1327, 7
        %v1330 = vshll.u32 %v1276, 16
        %v1332 = vor.u32 %v1329, %v1330
        %v1333 = vrot.slane %v1329, 4
        %v1335 = vshrl.u32 %v1277, 16
        %v1337 = vrot.slane %v1335, 7
        %v1338 = vshll.u32 %v1277, 16
        %v1340 = vor.u32 %v1337, %v1338
        %v1341 = vrot.slane %v1337, 4
        %s1358 = scalar_lea.vmem [#allocation2], 8
        %vm1359 = vcmask 60416
        %vm1360 = vsmask.f32 7938
        %vm1361 = vmand %vm1359, %vm1360
        %v1362 = vld [vmem:[%s1358] sm:$0xf]
        %v1363 = vsel %vm1361, %v1284, %v1362
        %1364 = vst [vmem:[%s1358] sm:$0xf] %v1363
        %vm1365 = vcmask 57344
        %vm1366 = vsmask.f32 256
        %vm1367 = vmand %vm1365, %vm1366
        %v1368 = vld [vmem:[%s1358 + $0x4] sm:$0x1]
        %v1369 = vsel %vm1367, %v1285, %v1368
        %1370 = vst [vmem:[%s1358 + $0x4] sm:$0x1] %v1369
        %v1371 = vld [vmem:[%s1358 + $0x8] sm:$0xf]
        %v1372 = vsel %vm1361, %v1292, %v1371
        %1373 = vst [vmem:[%s1358 + $0x8] sm:$0xf] %v1372
        %v1374 = vld [vmem:[%s1358 + $0xc] sm:$0x1]
        %v1375 = vsel %vm1367, %v1293, %v1374
        %1376 = vst [vmem:[%s1358 + $0xc] sm:$0x1] %v1375
        %v1377 = vld [vmem:[%s1358 + $0x10] sm:$0xf]
        %v1378 = vsel %vm1361, %v1300, %v1377
        %1379 = vst [vmem:[%s1358 + $0x10] sm:$0xf] %v1378
        %v1380 = vld [vmem:[%s1358 + $0x14] sm:$0x1]
        %v1381 = vsel %vm1367, %v1301, %v1380
        %1382 = vst [vmem:[%s1358 + $0x14] sm:$0x1] %v1381
        %v1383 = vld [vmem:[%s1358 + $0x18] sm:$0xf]
        %v1384 = vsel %vm1361, %v1308, %v1383
        %1385 = vst [vmem:[%s1358 + $0x18] sm:$0xf] %v1384
        %v1386 = vld [vmem:[%s1358 + $0x1c] sm:$0x1]
        %v1387 = vsel %vm1367, %v1309, %v1386
        %1388 = vst [vmem:[%s1358 + $0x1c] sm:$0x1] %v1387
        %v1389 = vld [vmem:[%s1358 + $0x20] sm:$0xf]
        %v1390 = vsel %vm1361, %v1316, %v1389
        %1391 = vst [vmem:[%s1358 + $0x20] sm:$0xf] %v1390
        %v1392 = vld [vmem:[%s1358 + $0x24] sm:$0x1]
        %v1393 = vsel %vm1367, %v1317, %v1392
        %1394 = vst [vmem:[%s1358 + $0x24] sm:$0x1] %v1393
        %v1395 = vld [vmem:[%s1358 + $0x28] sm:$0xf]
        %v1396 = vsel %vm1361, %v1324, %v1395
        %1397 = vst [vmem:[%s1358 + $0x28] sm:$0xf] %v1396
        %v1398 = vld [vmem:[%s1358 + $0x2c] sm:$0x1]
        %v1399 = vsel %vm1367, %v1325, %v1398
        %1400 = vst [vmem:[%s1358 + $0x2c] sm:$0x1] %v1399
        %v1401 = vld [vmem:[%s1358 + $0x30] sm:$0xf]
        %v1402 = vsel %vm1361, %v1332, %v1401
        %1403 = vst [vmem:[%s1358 + $0x30] sm:$0xf] %v1402
        %v1404 = vld [vmem:[%s1358 + $0x34] sm:$0x1]
        %v1405 = vsel %vm1367, %v1333, %v1404
        %1406 = vst [vmem:[%s1358 + $0x34] sm:$0x1] %v1405
        %v1407 = vld [vmem:[%s1358 + $0x38] sm:$0xf]
        %v1408 = vsel %vm1361, %v1340, %v1407
        %1409 = vst [vmem:[%s1358 + $0x38] sm:$0xf] %v1408
        %v1410 = vld [vmem:[%s1358 + $0x3c] sm:$0x1]
        %v1411 = vsel %vm1367, %v1341, %v1410
        %1412 = vst [vmem:[%s1358 + $0x3c] sm:$0x1] %v1411
        %v1413 = vld [vmem:[%s363] sm:$0xf]
        %v1414 = vld [vmem:[%s363 + $0x8] sm:$0xf]
        %v1415 = vld [vmem:[%s363 + $0x10] sm:$0xf]
        %v1416 = vld [vmem:[%s363 + $0x18] sm:$0xf]
        %v1417 = vld [vmem:[%s363 + $0x20] sm:$0xf]
        %v1418 = vld [vmem:[%s363 + $0x28] sm:$0xf]
        %v1419 = vld [vmem:[%s363 + $0x30] sm:$0xf]
        %v1420 = vld [vmem:[%s363 + $0x38] sm:$0xf]
        %v1421 = vld [vmem:[#allocation2] sm:$0xf]
        %v1422 = vld [vmem:[#allocation2 + $0x8] sm:$0xf]
        %v1423 = vld [vmem:[#allocation2 + $0x10] sm:$0xf]
        %v1424 = vld [vmem:[#allocation2 + $0x18] sm:$0xf]
        %v1425 = vld [vmem:[#allocation2 + $0x20] sm:$0xf]
        %v1426 = vld [vmem:[#allocation2 + $0x28] sm:$0xf]
        %v1427 = vld [vmem:[#allocation2 + $0x30] sm:$0xf]
        %v1428 = vld [vmem:[#allocation2 + $0x38] sm:$0xf]
        %v1429 = vld [vmem:[#allocation2 + $0x4] sm:$0x1]
        %v1430 = vld [vmem:[#allocation2 + $0xc] sm:$0x1]
        %v1431 = vld [vmem:[#allocation2 + $0x14] sm:$0x1]
        %v1432 = vld [vmem:[#allocation2 + $0x1c] sm:$0x1]
        %v1433 = vld [vmem:[#allocation2 + $0x24] sm:$0x1]
        %v1434 = vld [vmem:[#allocation2 + $0x2c] sm:$0x1]
        %v1435 = vld [vmem:[#allocation2 + $0x34] sm:$0x1]
        %v1436 = vld [vmem:[#allocation2 + $0x3c] sm:$0x1]
        %v1437 = vld [vmem:[#allocation2] sm:$0xe]
        %v1438 = vld [vmem:[#allocation2 + $0x8] sm:$0xe]
        %v1439 = vld [vmem:[#allocation2 + $0x10] sm:$0xe]
        %v1440 = vld [vmem:[#allocation2 + $0x18] sm:$0xe]
        %v1441 = vld [vmem:[#allocation2 + $0x20] sm:$0xe]
        %v1442 = vld [vmem:[#allocation2 + $0x28] sm:$0xe]
        %v1443 = vld [vmem:[#allocation2 + $0x30] sm:$0xe]
        %v1444 = vld [vmem:[#allocation2 + $0x38] sm:$0xe]
        %v1445 = vld [vmem:[%s1358] sm:$0xf]
        %v1446 = vld [vmem:[%s1358 + $0x8] sm:$0xf]
        %v1447 = vld [vmem:[%s1358 + $0x10] sm:$0xf]
        %v1448 = vld [vmem:[%s1358 + $0x18] sm:$0xf]
        %v1449 = vld [vmem:[%s1358 + $0x20] sm:$0xf]
        %v1450 = vld [vmem:[%s1358 + $0x28] sm:$0xf]
        %v1451 = vld [vmem:[%s1358 + $0x30] sm:$0xf]
        %v1452 = vld [vmem:[%s1358 + $0x38] sm:$0xf]
        %v1453 = vld [vmem:[%s1358 + $0x4] sm:$0x1]
        %v1454 = vld [vmem:[%s1358 + $0xc] sm:$0x1]
        %v1455 = vld [vmem:[%s1358 + $0x14] sm:$0x1]
        %v1456 = vld [vmem:[%s1358 + $0x1c] sm:$0x1]
        %v1457 = vld [vmem:[%s1358 + $0x24] sm:$0x1]
        %v1458 = vld [vmem:[%s1358 + $0x2c] sm:$0x1]
        %v1459 = vld [vmem:[%s1358 + $0x34] sm:$0x1]
        %v1460 = vld [vmem:[%s1358 + $0x3c] sm:$0x1]
        %v1461 = vld [vmem:[%s1358] sm:$0xe]
        %v1462 = vld [vmem:[%s1358 + $0x8] sm:$0xe]
        %v1463 = vld [vmem:[%s1358 + $0x10] sm:$0xe]
        %v1464 = vld [vmem:[%s1358 + $0x18] sm:$0xe]
        %v1465 = vld [vmem:[%s1358 + $0x20] sm:$0xe]
        %v1466 = vld [vmem:[%s1358 + $0x28] sm:$0xe]
        %v1467 = vld [vmem:[%s1358 + $0x30] sm:$0xe]
        %v1468 = vld [vmem:[%s1358 + $0x38] sm:$0xe]
        %s1469 = scalar_lea.vmem [#allocation2], 16
        %v1470 = vld [vmem:[%s1469] sm:$0xf]
        %v1471 = vld [vmem:[%s1469 + $0x8] sm:$0xf]
        %v1472 = vld [vmem:[%s1469 + $0x10] sm:$0xf]
        %v1473 = vld [vmem:[%s1469 + $0x18] sm:$0xf]
        %v1474 = vld [vmem:[%s1469 + $0x20] sm:$0xf]
        %v1475 = vld [vmem:[%s1469 + $0x28] sm:$0xf]
        %v1476 = vld [vmem:[%s1469 + $0x30] sm:$0xf]
        %v1477 = vld [vmem:[%s1469 + $0x38] sm:$0xf]
        %v1478 = vld [vmem:[%s1469 + $0x4] sm:$0x1]
        %v1479 = vld [vmem:[%s1469 + $0xc] sm:$0x1]
        %v1480 = vld [vmem:[%s1469 + $0x14] sm:$0x1]
        %v1481 = vld [vmem:[%s1469 + $0x1c] sm:$0x1]
        %v1482 = vld [vmem:[%s1469 + $0x24] sm:$0x1]
        %v1483 = vld [vmem:[%s1469 + $0x2c] sm:$0x1]
        %v1484 = vld [vmem:[%s1469 + $0x34] sm:$0x1]
        %v1485 = vld [vmem:[%s1469 + $0x3c] sm:$0x1]
        %v1486 = vld [vmem:[%s1469] sm:$0xe]
        %v1487 = vld [vmem:[%s1469 + $0x8] sm:$0xe]
        %v1488 = vld [vmem:[%s1469 + $0x10] sm:$0xe]
        %v1489 = vld [vmem:[%s1469 + $0x18] sm:$0xe]
        %v1490 = vld [vmem:[%s1469 + $0x20] sm:$0xe]
        %v1491 = vld [vmem:[%s1469 + $0x28] sm:$0xe]
        %v1492 = vld [vmem:[%s1469 + $0x30] sm:$0xe]
        %v1493 = vld [vmem:[%s1469 + $0x38] sm:$0xe]
        %v1510 = vunpack.c.l.b16 %v1421
        %v1511 = vunpack.c.l.b16 %v1429
        %v1512 = vunpack.c.l.b16 %v1422
        %v1513 = vunpack.c.l.b16 %v1430
        %v1514 = vunpack.c.l.b16 %v1423
        %v1515 = vunpack.c.l.b16 %v1431
        %v1516 = vunpack.c.l.b16 %v1424
        %v1517 = vunpack.c.l.b16 %v1432
        %v1518 = vunpack.c.l.b16 %v1425
        %v1519 = vunpack.c.l.b16 %v1433
        %v1520 = vunpack.c.l.b16 %v1426
        %v1521 = vunpack.c.l.b16 %v1434
        %v1522 = vunpack.c.l.b16 %v1427
        %v1523 = vunpack.c.l.b16 %v1435
        %v1524 = vunpack.c.l.b16 %v1428
        %v1525 = vunpack.c.l.b16 %v1436
        %v1526 = vpack.c.b16 %v1511, %v1510
        %v1527 = vpack.c.b16 %v1513, %v1512
        %v1528 = vpack.c.b16 %v1515, %v1514
        %v1529 = vpack.c.b16 %v1517, %v1516
        %v1530 = vpack.c.b16 %v1519, %v1518
        %v1531 = vpack.c.b16 %v1521, %v1520
        %v1532 = vpack.c.b16 %v1523, %v1522
        %v1533 = vpack.c.b16 %v1525, %v1524
        %v1535 = vshrl.u32 %v1526, 16
        %v1537 = vshll.u32 %v1526, 16
        %v1539 = vrot.slane %v1537, 1
        %v1540 = vor.u32 %v1535, %v1539
        %v1542 = vshrl.u32 %v1527, 16
        %v1544 = vshll.u32 %v1527, 16
        %v1546 = vrot.slane %v1544, 1
        %v1547 = vor.u32 %v1542, %v1546
        %v1549 = vshrl.u32 %v1528, 16
        %v1551 = vshll.u32 %v1528, 16
        %v1553 = vrot.slane %v1551, 1
        %v1554 = vor.u32 %v1549, %v1553
        %v1556 = vshrl.u32 %v1529, 16
        %v1558 = vshll.u32 %v1529, 16
        %v1560 = vrot.slane %v1558, 1
        %v1561 = vor.u32 %v1556, %v1560
        %v1563 = vshrl.u32 %v1530, 16
        %v1565 = vshll.u32 %v1530, 16
        %v1567 = vrot.slane %v1565, 1
        %v1568 = vor.u32 %v1563, %v1567
        %v1570 = vshrl.u32 %v1531, 16
        %v1572 = vshll.u32 %v1531, 16
        %v1574 = vrot.slane %v1572, 1
        %v1575 = vor.u32 %v1570, %v1574
        %v1577 = vshrl.u32 %v1532, 16
        %v1579 = vshll.u32 %v1532, 16
        %v1581 = vrot.slane %v1579, 1
        %v1582 = vor.u32 %v1577, %v1581
        %v1584 = vshrl.u32 %v1533, 16
        %v1586 = vshll.u32 %v1533, 16
        %v1588 = vrot.slane %v1586, 1
        %v1589 = vor.u32 %v1584, %v1588
        %1590 = vrot.lane.b32.xlu0 %v1540, 8
        %v1591 = vpop.permute.xlu0 %1590
        %1592 = vrot.lane.b32.xlu0 %v1547, 8
        %v1593 = vpop.permute.xlu0 %1592
        %1594 = vrot.lane.b32.xlu0 %v1554, 8
        %v1595 = vpop.permute.xlu0 %1594
        %1596 = vrot.lane.b32.xlu0 %v1561, 8
        %v1597 = vpop.permute.xlu0 %1596
        %1598 = vrot.lane.b32.xlu0 %v1568, 8
        %v1599 = vpop.permute.xlu0 %1598
        %1600 = vrot.lane.b32.xlu0 %v1575, 8
        %v1601 = vpop.permute.xlu0 %1600
        %1602 = vrot.lane.b32.xlu0 %v1582, 8
        %v1603 = vpop.permute.xlu0 %1602
        %1604 = vrot.lane.b32.xlu0 %v1589, 8
        %v1605 = vpop.permute.xlu0 %1604
        %v1614 = vunpack.c.l.b16 %v1437
        %v1615 = vunpack.c.l.b16 %v1438
        %v1616 = vunpack.c.l.b16 %v1439
        %v1617 = vunpack.c.l.b16 %v1440
        %v1618 = vunpack.c.l.b16 %v1441
        %v1619 = vunpack.c.l.b16 %v1442
        %v1620 = vunpack.c.l.b16 %v1443
        %v1621 = vunpack.c.l.b16 %v1444
        %v1622 = vpack.c.b16 %v1511, %v1614
        %v1623 = vpack.c.b16 %v1513, %v1615
        %v1624 = vpack.c.b16 %v1515, %v1616
        %v1625 = vpack.c.b16 %v1517, %v1617
        %v1626 = vpack.c.b16 %v1519, %v1618
        %v1627 = vpack.c.b16 %v1521, %v1619
        %v1628 = vpack.c.b16 %v1523, %v1620
        %v1629 = vpack.c.b16 %v1525, %v1621
        %v1630 = vrot.slane %v1622, 1
        %v1631 = vrot.slane %v1623, 1
        %v1632 = vrot.slane %v1624, 1
        %v1633 = vrot.slane %v1625, 1
        %v1634 = vrot.slane %v1626, 1
        %v1635 = vrot.slane %v1627, 1
        %v1636 = vrot.slane %v1628, 1
        %v1637 = vrot.slane %v1629, 1
        %1638 = vrot.lane.b32.xlu0 %v1630, 16
        %v1639 = vpop.permute.xlu0 %1638
        %1640 = vrot.lane.b32.xlu0 %v1631, 16
        %v1641 = vpop.permute.xlu0 %1640
        %1642 = vrot.lane.b32.xlu0 %v1632, 16
        %v1643 = vpop.permute.xlu0 %1642
        %1644 = vrot.lane.b32.xlu0 %v1633, 16
        %v1645 = vpop.permute.xlu0 %1644
        %1646 = vrot.lane.b32.xlu0 %v1634, 16
        %v1647 = vpop.permute.xlu0 %1646
        %1648 = vrot.lane.b32.xlu0 %v1635, 16
        %v1649 = vpop.permute.xlu0 %1648
        %1650 = vrot.lane.b32.xlu0 %v1636, 16
        %v1651 = vpop.permute.xlu0 %1650
        %1652 = vrot.lane.b32.xlu0 %v1637, 16
        %v1653 = vpop.permute.xlu0 %1652
        %v1662 = vunpack.c.l.b16 %v1445
        %v1663 = vunpack.c.l.b16 %v1446
        %v1664 = vunpack.c.l.b16 %v1447
        %v1665 = vunpack.c.l.b16 %v1448
        %v1666 = vunpack.c.l.b16 %v1449
        %v1667 = vunpack.c.l.b16 %v1450
        %v1668 = vunpack.c.l.b16 %v1451
        %v1669 = vunpack.c.l.b16 %v1452
        %v1670 = vpack.c.b16 %v1662, %v1662
        %v1671 = vpack.c.b16 %v1663, %v1663
        %v1672 = vpack.c.b16 %v1664, %v1664
        %v1673 = vpack.c.b16 %v1665, %v1665
        %v1674 = vpack.c.b16 %v1666, %v1666
        %v1675 = vpack.c.b16 %v1667, %v1667
        %v1676 = vpack.c.b16 %v1668, %v1668
        %v1677 = vpack.c.b16 %v1669, %v1669
        %1678 = vrot.lane.b32.xlu0 %v1670, 24
        %v1679 = vpop.permute.xlu0 %1678
        %1680 = vrot.lane.b32.xlu0 %v1671, 24
        %v1681 = vpop.permute.xlu0 %1680
        %1682 = vrot.lane.b32.xlu0 %v1672, 24
        %v1683 = vpop.permute.xlu0 %1682
        %1684 = vrot.lane.b32.xlu0 %v1673, 24
        %v1685 = vpop.permute.xlu0 %1684
        %1686 = vrot.lane.b32.xlu0 %v1674, 24
        %v1687 = vpop.permute.xlu0 %1686
        %1688 = vrot.lane.b32.xlu0 %v1675, 24
        %v1689 = vpop.permute.xlu0 %1688
        %1690 = vrot.lane.b32.xlu0 %v1676, 24
        %v1691 = vpop.permute.xlu0 %1690
        %1692 = vrot.lane.b32.xlu0 %v1677, 24
        %v1693 = vpop.permute.xlu0 %1692
        %v1702 = vunpack.c.l.b16 %v1453
        %v1703 = vunpack.c.l.b16 %v1454
        %v1704 = vunpack.c.l.b16 %v1455
        %v1705 = vunpack.c.l.b16 %v1456
        %v1706 = vunpack.c.l.b16 %v1457
        %v1707 = vunpack.c.l.b16 %v1458
        %v1708 = vunpack.c.l.b16 %v1459
        %v1709 = vunpack.c.l.b16 %v1460
        %v1710 = vpack.c.b16 %v1702, %v1662
        %v1711 = vpack.c.b16 %v1703, %v1663
        %v1712 = vpack.c.b16 %v1704, %v1664
        %v1713 = vpack.c.b16 %v1705, %v1665
        %v1714 = vpack.c.b16 %v1706, %v1666
        %v1715 = vpack.c.b16 %v1707, %v1667
        %v1716 = vpack.c.b16 %v1708, %v1668
        %v1717 = vpack.c.b16 %v1709, %v1669
        %v1719 = vshrl.u32 %v1710, 16
        %v1721 = vshll.u32 %v1710, 16
        %v1723 = vrot.slane %v1721, 1
        %v1724 = vor.u32 %v1719, %v1723
        %v1726 = vshrl.u32 %v1711, 16
        %v1728 = vshll.u32 %v1711, 16
        %v1730 = vrot.slane %v1728, 1
        %v1731 = vor.u32 %v1726, %v1730
        %v1733 = vshrl.u32 %v1712, 16
        %v1735 = vshll.u32 %v1712, 16
        %v1737 = vrot.slane %v1735, 1
        %v1738 = vor.u32 %v1733, %v1737
        %v1740 = vshrl.u32 %v1713, 16
        %v1742 = vshll.u32 %v1713, 16
        %v1744 = vrot.slane %v1742, 1
        %v1745 = vor.u32 %v1740, %v1744
        %v1747 = vshrl.u32 %v1714, 16
        %v1749 = vshll.u32 %v1714, 16
        %v1751 = vrot.slane %v1749, 1
        %v1752 = vor.u32 %v1747, %v1751
        %v1754 = vshrl.u32 %v1715, 16
        %v1756 = vshll.u32 %v1715, 16
        %v1758 = vrot.slane %v1756, 1
        %v1759 = vor.u32 %v1754, %v1758
        %v1761 = vshrl.u32 %v1716, 16
        %v1763 = vshll.u32 %v1716, 16
        %v1765 = vrot.slane %v1763, 1
        %v1766 = vor.u32 %v1761, %v1765
        %v1768 = vshrl.u32 %v1717, 16
        %v1770 = vshll.u32 %v1717, 16
        %v1772 = vrot.slane %v1770, 1
        %v1773 = vor.u32 %v1768, %v1772
        %1774 = vrot.lane.b32.xlu0 %v1724, 32
        %v1775 = vpop.permute.xlu0 %1774
        %1776 = vrot.lane.b32.xlu0 %v1731, 32
        %v1777 = vpop.permute.xlu0 %1776
        %1778 = vrot.lane.b32.xlu0 %v1738, 32
        %v1779 = vpop.permute.xlu0 %1778
        %1780 = vrot.lane.b32.xlu0 %v1745, 32
        %v1781 = vpop.permute.xlu0 %1780
        %1782 = vrot.lane.b32.xlu0 %v1752, 32
        %v1783 = vpop.permute.xlu0 %1782
        %1784 = vrot.lane.b32.xlu0 %v1759, 32
        %v1785 = vpop.permute.xlu0 %1784
        %1786 = vrot.lane.b32.xlu0 %v1766, 32
        %v1787 = vpop.permute.xlu0 %1786
        %1788 = vrot.lane.b32.xlu0 %v1773, 32
        %v1789 = vpop.permute.xlu0 %1788
        %v1798 = vunpack.c.l.b16 %v1461
        %v1799 = vunpack.c.l.b16 %v1462
        %v1800 = vunpack.c.l.b16 %v1463
        %v1801 = vunpack.c.l.b16 %v1464
        %v1802 = vunpack.c.l.b16 %v1465
        %v1803 = vunpack.c.l.b16 %v1466
        %v1804 = vunpack.c.l.b16 %v1467
        %v1805 = vunpack.c.l.b16 %v1468
        %v1806 = vpack.c.b16 %v1702, %v1798
        %v1807 = vpack.c.b16 %v1703, %v1799
        %v1808 = vpack.c.b16 %v1704, %v1800
        %v1809 = vpack.c.b16 %v1705, %v1801
        %v1810 = vpack.c.b16 %v1706, %v1802
        %v1811 = vpack.c.b16 %v1707, %v1803
        %v1812 = vpack.c.b16 %v1708, %v1804
        %v1813 = vpack.c.b16 %v1709, %v1805
        %v1814 = vrot.slane %v1806, 1
        %v1815 = vrot.slane %v1807, 1
        %v1816 = vrot.slane %v1808, 1
        %v1817 = vrot.slane %v1809, 1
        %v1818 = vrot.slane %v1810, 1
        %v1819 = vrot.slane %v1811, 1
        %v1820 = vrot.slane %v1812, 1
        %v1821 = vrot.slane %v1813, 1
        %1822 = vrot.lane.b32.xlu0 %v1814, 40
        %v1823 = vpop.permute.xlu0 %1822
        %1824 = vrot.lane.b32.xlu0 %v1815, 40
        %v1825 = vpop.permute.xlu0 %1824
        %1826 = vrot.lane.b32.xlu0 %v1816, 40
        %v1827 = vpop.permute.xlu0 %1826
        %1828 = vrot.lane.b32.xlu0 %v1817, 40
        %v1829 = vpop.permute.xlu0 %1828
        %1830 = vrot.lane.b32.xlu0 %v1818, 40
        %v1831 = vpop.permute.xlu0 %1830
        %1832 = vrot.lane.b32.xlu0 %v1819, 40
        %v1833 = vpop.permute.xlu0 %1832
        %1834 = vrot.lane.b32.xlu0 %v1820, 40
        %v1835 = vpop.permute.xlu0 %1834
        %1836 = vrot.lane.b32.xlu0 %v1821, 40
        %v1837 = vpop.permute.xlu0 %1836
        %v1846 = vunpack.c.l.b16 %v1470
        %v1847 = vunpack.c.l.b16 %v1471
        %v1848 = vunpack.c.l.b16 %v1472
        %v1849 = vunpack.c.l.b16 %v1473
        %v1850 = vunpack.c.l.b16 %v1474
        %v1851 = vunpack.c.l.b16 %v1475
        %v1852 = vunpack.c.l.b16 %v1476
        %v1853 = vunpack.c.l.b16 %v1477
        %v1854 = vpack.c.b16 %v1846, %v1846
        %v1855 = vpack.c.b16 %v1847, %v1847
        %v1856 = vpack.c.b16 %v1848, %v1848
        %v1857 = vpack.c.b16 %v1849, %v1849
        %v1858 = vpack.c.b16 %v1850, %v1850
        %v1859 = vpack.c.b16 %v1851, %v1851
        %v1860 = vpack.c.b16 %v1852, %v1852
        %v1861 = vpack.c.b16 %v1853, %v1853
        %1862 = vrot.lane.b32.xlu0 %v1854, 48
        %v1863 = vpop.permute.xlu0 %1862
        %1864 = vrot.lane.b32.xlu0 %v1855, 48
        %v1865 = vpop.permute.xlu0 %1864
        %1866 = vrot.lane.b32.xlu0 %v1856, 48
        %v1867 = vpop.permute.xlu0 %1866
        %1868 = vrot.lane.b32.xlu0 %v1857, 48
        %v1869 = vpop.permute.xlu0 %1868
        %1870 = vrot.lane.b32.xlu0 %v1858, 48
        %v1871 = vpop.permute.xlu0 %1870
        %1872 = vrot.lane.b32.xlu0 %v1859, 48
        %v1873 = vpop.permute.xlu0 %1872
        %1874 = vrot.lane.b32.xlu0 %v1860, 48
        %v1875 = vpop.permute.xlu0 %1874
        %1876 = vrot.lane.b32.xlu0 %v1861, 48
        %v1877 = vpop.permute.xlu0 %1876
        %v1886 = vunpack.c.l.b16 %v1478
        %v1887 = vunpack.c.l.b16 %v1479
        %v1888 = vunpack.c.l.b16 %v1480
        %v1889 = vunpack.c.l.b16 %v1481
        %v1890 = vunpack.c.l.b16 %v1482
        %v1891 = vunpack.c.l.b16 %v1483
        %v1892 = vunpack.c.l.b16 %v1484
        %v1893 = vunpack.c.l.b16 %v1485
        %v1894 = vpack.c.b16 %v1886, %v1846
        %v1895 = vpack.c.b16 %v1887, %v1847
        %v1896 = vpack.c.b16 %v1888, %v1848
        %v1897 = vpack.c.b16 %v1889, %v1849
        %v1898 = vpack.c.b16 %v1890, %v1850
        %v1899 = vpack.c.b16 %v1891, %v1851
        %v1900 = vpack.c.b16 %v1892, %v1852
        %v1901 = vpack.c.b16 %v1893, %v1853
        %v1903 = vshrl.u32 %v1894, 16
        %v1905 = vshll.u32 %v1894, 16
        %v1907 = vrot.slane %v1905, 1
        %v1908 = vor.u32 %v1903, %v1907
        %v1910 = vshrl.u32 %v1895, 16
        %v1912 = vshll.u32 %v1895, 16
        %v1914 = vrot.slane %v1912, 1
        %v1915 = vor.u32 %v1910, %v1914
        %v1917 = vshrl.u32 %v1896, 16
        %v1919 = vshll.u32 %v1896, 16
        %v1921 = vrot.slane %v1919, 1
        %v1922 = vor.u32 %v1917, %v1921
        %v1924 = vshrl.u32 %v1897, 16
        %v1926 = vshll.u32 %v1897, 16
        %v1928 = vrot.slane %v1926, 1
        %v1929 = vor.u32 %v1924, %v1928
        %v1931 = vshrl.u32 %v1898, 16
        %v1933 = vshll.u32 %v1898, 16
        %v1935 = vrot.slane %v1933, 1
        %v1936 = vor.u32 %v1931, %v1935
        %v1938 = vshrl.u32 %v1899, 16
        %v1940 = vshll.u32 %v1899, 16
        %v1942 = vrot.slane %v1940, 1
        %v1943 = vor.u32 %v1938, %v1942
        %v1945 = vshrl.u32 %v1900, 16
        %v1947 = vshll.u32 %v1900, 16
        %v1949 = vrot.slane %v1947, 1
        %v1950 = vor.u32 %v1945, %v1949
        %v1952 = vshrl.u32 %v1901, 16
        %v1954 = vshll.u32 %v1901, 16
        %v1956 = vrot.slane %v1954, 1
        %v1957 = vor.u32 %v1952, %v1956
        %1958 = vrot.lane.b32.xlu0 %v1908, 56
        %v1959 = vpop.permute.xlu0 %1958
        %1960 = vrot.lane.b32.xlu0 %v1915, 56
        %v1961 = vpop.permute.xlu0 %1960
        %1962 = vrot.lane.b32.xlu0 %v1922, 56
        %v1963 = vpop.permute.xlu0 %1962
        %1964 = vrot.lane.b32.xlu0 %v1929, 56
        %v1965 = vpop.permute.xlu0 %1964
        %1966 = vrot.lane.b32.xlu0 %v1936, 56
        %v1967 = vpop.permute.xlu0 %1966
        %1968 = vrot.lane.b32.xlu0 %v1943, 56
        %v1969 = vpop.permute.xlu0 %1968
        %1970 = vrot.lane.b32.xlu0 %v1950, 56
        %v1971 = vpop.permute.xlu0 %1970
        %1972 = vrot.lane.b32.xlu0 %v1957, 56
        %v1973 = vpop.permute.xlu0 %1972
        %v1982 = vunpack.c.l.b16 %v1486
        %v1983 = vunpack.c.l.b16 %v1487
        %v1984 = vunpack.c.l.b16 %v1488
        %v1985 = vunpack.c.l.b16 %v1489
        %v1986 = vunpack.c.l.b16 %v1490
        %v1987 = vunpack.c.l.b16 %v1491
        %v1988 = vunpack.c.l.b16 %v1492
        %v1989 = vunpack.c.l.b16 %v1493
        %v1990 = vpack.c.b16 %v1886, %v1982
        %v1991 = vpack.c.b16 %v1887, %v1983
        %v1992 = vpack.c.b16 %v1888, %v1984
        %v1993 = vpack.c.b16 %v1889, %v1985
        %v1994 = vpack.c.b16 %v1890, %v1986
        %v1995 = vpack.c.b16 %v1891, %v1987
        %v1996 = vpack.c.b16 %v1892, %v1988
        %v1997 = vpack.c.b16 %v1893, %v1989
        %v1998 = vrot.slane %v1990, 1
        %v1999 = vrot.slane %v1991, 1
        %v2000 = vrot.slane %v1992, 1
        %v2001 = vrot.slane %v1993, 1
        %v2002 = vrot.slane %v1994, 1
        %v2003 = vrot.slane %v1995, 1
        %v2004 = vrot.slane %v1996, 1
        %v2005 = vrot.slane %v1997, 1
        %2006 = vrot.lane.b32.xlu0 %v1998, 64
        %v2007 = vpop.permute.xlu0 %2006
        %2008 = vrot.lane.b32.xlu0 %v1999, 64
        %v2009 = vpop.permute.xlu0 %2008
        %2010 = vrot.lane.b32.xlu0 %v2000, 64
        %v2011 = vpop.permute.xlu0 %2010
        %2012 = vrot.lane.b32.xlu0 %v2001, 64
        %v2013 = vpop.permute.xlu0 %2012
        %2014 = vrot.lane.b32.xlu0 %v2002, 64
        %v2015 = vpop.permute.xlu0 %2014
        %2016 = vrot.lane.b32.xlu0 %v2003, 64
        %v2017 = vpop.permute.xlu0 %2016
        %2018 = vrot.lane.b32.xlu0 %v2004, 64
        %v2019 = vpop.permute.xlu0 %2018
        %2020 = vrot.lane.b32.xlu0 %v2005, 64
        %v2021 = vpop.permute.xlu0 %2020
        %v2030 = vunpack.c.l.b16 %v1413
        %v2031 = vunpack.c.l.b16 %v1414
        %v2032 = vunpack.c.l.b16 %v1415
        %v2033 = vunpack.c.l.b16 %v1416
        %v2034 = vunpack.c.l.b16 %v1417
        %v2035 = vunpack.c.l.b16 %v1418
        %v2036 = vunpack.c.l.b16 %v1419
        %v2037 = vunpack.c.l.b16 %v1420
        %v2038 = vpack.c.b16 %v2030, %v2030
        %v2039 = vpack.c.b16 %v2031, %v2031
        %v2040 = vpack.c.b16 %v2032, %v2032
        %v2041 = vpack.c.b16 %v2033, %v2033
        %v2042 = vpack.c.b16 %v2034, %v2034
        %v2043 = vpack.c.b16 %v2035, %v2035
        %v2044 = vpack.c.b16 %v2036, %v2036
        %v2045 = vpack.c.b16 %v2037, %v2037
        %2046 = vrot.lane.b32.xlu0 %v2038, 72
        %v2047 = vpop.permute.xlu0 %2046
        %2048 = vrot.lane.b32.xlu0 %v2039, 72
        %v2049 = vpop.permute.xlu0 %2048
        %2050 = vrot.lane.b32.xlu0 %v2040, 72
        %v2051 = vpop.permute.xlu0 %2050
        %2052 = vrot.lane.b32.xlu0 %v2041, 72
        %v2053 = vpop.permute.xlu0 %2052
        %2054 = vrot.lane.b32.xlu0 %v2042, 72
        %v2055 = vpop.permute.xlu0 %2054
        %2056 = vrot.lane.b32.xlu0 %v2043, 72
        %v2057 = vpop.permute.xlu0 %2056
        %2058 = vrot.lane.b32.xlu0 %v2044, 72
        %v2059 = vpop.permute.xlu0 %2058
        %2060 = vrot.lane.b32.xlu0 %v2045, 72
        %v2061 = vpop.permute.xlu0 %2060
        %v2064 = vsel %vm968, %v1421, %v1591
        %v2067 = vsel %vm968, %v1422, %v1593
        %v2070 = vsel %vm968, %v1423, %v1595
        %v2073 = vsel %vm968, %v1424, %v1597
        %v2076 = vsel %vm968, %v1425, %v1599
        %v2079 = vsel %vm968, %v1426, %v1601
        %v2082 = vsel %vm968, %v1427, %v1603
        %v2085 = vsel %vm968, %v1428, %v1605
        %v2087 = vsel %vm1002, %v2064, %v1639
        %v2089 = vsel %vm1002, %v2067, %v1641
        %v2091 = vsel %vm1002, %v2070, %v1643
        %v2093 = vsel %vm1002, %v2073, %v1645
        %v2095 = vsel %vm1002, %v2076, %v1647
        %v2097 = vsel %vm1002, %v2079, %v1649
        %v2099 = vsel %vm1002, %v2082, %v1651
        %v2101 = vsel %vm1002, %v2085, %v1653
        %v2103 = vsel %vm1036, %v2087, %v1679
        %v2105 = vsel %vm1036, %v2089, %v1681
        %v2107 = vsel %vm1036, %v2091, %v1683
        %v2109 = vsel %vm1036, %v2093, %v1685
        %v2111 = vsel %vm1036, %v2095, %v1687
        %v2113 = vsel %vm1036, %v2097, %v1689
        %v2115 = vsel %vm1036, %v2099, %v1691
        %v2117 = vsel %vm1036, %v2101, %v1693
        %v2119 = vsel %vm1070, %v2103, %v1775
        %v2121 = vsel %vm1070, %v2105, %v1777
        %v2123 = vsel %vm1070, %v2107, %v1779
        %v2125 = vsel %vm1070, %v2109, %v1781
        %v2127 = vsel %vm1070, %v2111, %v1783
        %v2129 = vsel %vm1070, %v2113, %v1785
        %v2131 = vsel %vm1070, %v2115, %v1787
        %v2133 = vsel %vm1070, %v2117, %v1789
        %vm2134 = vcmask 326656
        %v2136 = vsel %vm2134, %v2119, %v1823
        %v2138 = vsel %vm2134, %v2121, %v1825
        %v2140 = vsel %vm2134, %v2123, %v1827
        %v2142 = vsel %vm2134, %v2125, %v1829
        %v2144 = vsel %vm2134, %v2127, %v1831
        %v2146 = vsel %vm2134, %v2129, %v1833
        %v2148 = vsel %vm2134, %v2131, %v1835
        %v2150 = vsel %vm2134, %v2133, %v1837
        %vm2151 = vcmask 392192
        %v2153 = vsel %vm2151, %v2136, %v1863
        %v2155 = vsel %vm2151, %v2138, %v1865
        %v2157 = vsel %vm2151, %v2140, %v1867
        %v2159 = vsel %vm2151, %v2142, %v1869
        %v2161 = vsel %vm2151, %v2144, %v1871
        %v2163 = vsel %vm2151, %v2146, %v1873
        %v2165 = vsel %vm2151, %v2148, %v1875
        %v2167 = vsel %vm2151, %v2150, %v1877
        %vm2168 = vcmask 457728
        %v2170 = vsel %vm2168, %v2153, %v1959
        %v2172 = vsel %vm2168, %v2155, %v1961
        %v2174 = vsel %vm2168, %v2157, %v1963
        %v2176 = vsel %vm2168, %v2159, %v1965
        %v2178 = vsel %vm2168, %v2161, %v1967
        %v2180 = vsel %vm2168, %v2163, %v1969
        %v2182 = vsel %vm2168, %v2165, %v1971
        %v2184 = vsel %vm2168, %v2167, %v1973
        %vm2185 = vcmask 523264
        %v2187 = vsel %vm2185, %v2170, %v2007
        %v2189 = vsel %vm2185, %v2172, %v2009
        %v2191 = vsel %vm2185, %v2174, %v2011
        %v2193 = vsel %vm2185, %v2176, %v2013
        %v2195 = vsel %vm2185, %v2178, %v2015
        %v2197 = vsel %vm2185, %v2180, %v2017
        %v2199 = vsel %vm2185, %v2182, %v2019
        %v2201 = vsel %vm2185, %v2184, %v2021
        %vm2202 = vcmask 588800
        %v2204 = vsel %vm2202, %v2187, %v2047
        %v2206 = vsel %vm2202, %v2189, %v2049
        %v2208 = vsel %vm2202, %v2191, %v2051
        %v2210 = vsel %vm2202, %v2193, %v2053
        %v2212 = vsel %vm2202, %v2195, %v2055
        %v2214 = vsel %vm2202, %v2197, %v2057
        %v2216 = vsel %vm2202, %v2199, %v2059
        %v2218 = vsel %vm2202, %v2201, %v2061
        %v2219 = vld [vmem:[%s6] sm:$0xf]
        %v2220 = vld [vmem:[%s6 + $0x4] sm:$0xf]
        %v2221 = vld [vmem:[%s6 + $0x8] sm:$0xf]
        %v2222 = vld [vmem:[%s6 + $0xc] sm:$0xf]
        %v2223 = vld [vmem:[%s6 + $0x10] sm:$0xf]
        %v2224 = vld [vmem:[%s6 + $0x14] sm:$0xf]
        %v2225 = vld [vmem:[%s6 + $0x18] sm:$0xf]
        %v2226 = vld [vmem:[%s6 + $0x1c] sm:$0xf]
        %v2227 = vld [vmem:[%s6 + $0x20] sm:$0xf]
        %v2228 = vld [vmem:[%s6 + $0x24] sm:$0x3]
        %v2229 = vld [vmem:[%s7] sm:$0x1]
        %v2231 = vlaneseq
        %v2232 = vshrl.u32 %v2231, 7
        %v2233 = vsub.s32 0, %v2232
        %v2234 = vrot.slane %v2229, %v2233
        %v2244 = vunpack.c.l.b16 %v2204
        %v2245 = vunpack.c.l.b16 %v2206
        %v2246 = vunpack.c.l.b16 %v2208
        %v2247 = vunpack.c.l.b16 %v2210
        %v2248 = vunpack.c.l.b16 %v2212
        %v2249 = vunpack.c.l.b16 %v2214
        %v2250 = vunpack.c.l.b16 %v2216
        %v2251 = vunpack.c.l.b16 %v2218
        %v2252 = vpack.c.b16 %v2245, %v2244
        %v2253 = vpack.c.b16 %v2247, %v2246
        %v2254 = vpack.c.b16 %v2249, %v2248
        %v2255 = vpack.c.b16 %v2251, %v2250
        %v2266 = vunpack.c.l.b16 %v2219
        %v2267 = vunpack.c.l.b16 %v2220
        %v2268 = vunpack.c.l.b16 %v2221
        %v2269 = vunpack.c.l.b16 %v2222
        %v2270 = vunpack.c.l.b16 %v2223
        %v2271 = vunpack.c.l.b16 %v2224
        %v2272 = vunpack.c.l.b16 %v2225
        %v2273 = vunpack.c.l.b16 %v2226
        %v2274 = vunpack.c.l.b16 %v2227
        %v2275 = vunpack.c.l.b16 %v2228
        %v2276 = vpack.c.b16 %v2267, %v2266
        %v2277 = vpack.c.b16 %v2269, %v2268
        %v2278 = vpack.c.b16 %v2271, %v2270
        %v2279 = vpack.c.b16 %v2273, %v2272
        %v2280 = vpack.c.b16 %v2275, %v2274
        %vm2285 = vcmask 621568
        %v2287 = vsel %vm2285, %v2252, 0
        %v2290 = vsel %vm2285, %v2253, 0
        %v2293 = vsel %vm2285, %v2254, 0
        %v2296 = vsel %vm2285, %v2255, 0
        %vm2298 = vcmask 1045504
        %v2300 = vsel %vm2298, %v2280, 0
        %2302 = vmatprep.subr.bf16.mxu0 0
        %2303 = vmatpush1.bf16.msra.mxu0 %v2276
        %2304 = vmatprep.subr.bf16.mxu0 0
        %2305 = vmatpush1.bf16.msra.mxu0 %v2277
        %2306 = vmatprep.subr.bf16.mxu0 0
        %2307 = vmatpush1.bf16.msra.mxu0 %v2278
        %2308 = vmatprep.subr.bf16.mxu0 0
        %2309 = vmatpush1.bf16.msra.mxu0 %v2279
        %2310 = vmatprep.subr.bf16.mxu0 0
        %2311 = vmatpush1.bf16.msra.mxu0 %v2300
        %2312 = vmatprep.subr.bf16.mxu0 0
        %2313 = vmatpush1.bf16.msra.mxu0 0
        %2314 = vmatprep.subr.bf16.mxu0 0
        %2315 = vmatpush1.bf16.msra.mxu0 0
        %2316 = vmatprep.subr.bf16.mxu0 0
        %2317 = vmatpush1.bf16.msra.mxu0 0
        %2318 = vmatprep.subr.bf16.mxu0 0
        %2319 = vmatpush1.bf16.msra.mxu0 0
        %2320 = vmatprep.subr.bf16.mxu0 0
        %2321 = vmatpush1.bf16.msra.mxu0 0
        %2322 = vmatprep.subr.bf16.mxu0 0
        %2323 = vmatpush1.bf16.msra.mxu0 0
        %2324 = vmatprep.subr.bf16.mxu0 0
        %2325 = vmatpush1.bf16.msra.mxu0 0
        %2326 = vmatprep.subr.bf16.mxu0 0
        %2327 = vmatpush1.bf16.msra.mxu0 0
        %2328 = vmatprep.subr.bf16.mxu0 0
        %2329 = vmatpush1.bf16.msra.mxu0 0
        %2330 = vmatprep.subr.bf16.mxu0 0
        %2331 = vmatpush1.bf16.msra.mxu0 0
        %2332 = vmatprep.subr.bf16.mxu0 0
        %2333 = vmatpush1.bf16.msra.mxu0 0
        %2334 = vmatprep.mubr.bf16.mxu0 0
        %2335 = vmatmul.mubr.bf16.gmra.mrb[0].mxu0 %v2287
        %v2336 = vpop.f32.mrb[0].mxu0
        %v2337 = vadd.f32 %v2234, %v2336
        %v2338 = vpop.f32.mrb[0].mxu0
        %v2339 = vpop.f32.mrb[0].mxu0
        %v2340 = vadd.f32 %v2234, %v2339
        %v2341 = vpop.f32.mrb[0].mxu0
        %2342 = vmatprep.mubr.bf16.mxu0 0
        %2343 = vmatmul.mubr.bf16.gmra.mrb[0].mxu0 %v2290
        %v2344 = vpop.f32.mrb[0].mxu0
        %v2345 = vadd.f32 %v2234, %v2344
        %v2346 = vpop.f32.mrb[0].mxu0
        %v2347 = vpop.f32.mrb[0].mxu0
        %v2348 = vadd.f32 %v2234, %v2347
        %v2349 = vpop.f32.mrb[0].mxu0
        %2350 = vmatprep.mubr.bf16.mxu0 0
        %2351 = vmatmul.mubr.bf16.gmra.mrb[0].mxu0 %v2293
        %v2352 = vpop.f32.mrb[0].mxu0
        %v2353 = vadd.f32 %v2234, %v2352
        %v2354 = vpop.f32.mrb[0].mxu0
        %v2355 = vpop.f32.mrb[0].mxu0
        %v2356 = vadd.f32 %v2234, %v2355
        %v2357 = vpop.f32.mrb[0].mxu0
        %2358 = vmatprep.mubr.bf16.mxu0 0
        %2359 = vmatmul.mubr.bf16.gmra.mrb[0].mxu0 %v2296
        %v2360 = vpop.f32.mrb[0].mxu0
        %v2361 = vadd.f32 %v2234, %v2360
        %v2362 = vpop.f32.mrb[0].mxu0
        %v2363 = vpop.f32.mrb[0].mxu0
        %v2364 = vadd.f32 %v2234, %v2363
        %v2365 = vpop.f32.mrb[0].mxu0
        %2366 = vdwg.mxu0
        %v2367 = vmax.f32 %v2337, 0.0
        %v2368 = vmax.f32 %v2340, 0.0
        %v2369 = vmax.f32 %v2345, 0.0
        %v2370 = vmax.f32 %v2348, 0.0
        %v2371 = vmax.f32 %v2353, 0.0
        %v2372 = vmax.f32 %v2356, 0.0
        %v2373 = vmax.f32 %v2361, 0.0
        %v2374 = vmax.f32 %v2364, 0.0
        %2375 = vst [vmem:[%s343] sm:$0xff] %v2367
        %2376 = vst [vmem:[%s343 + $0x8] sm:$0xff] %v2368
        %2377 = vst [vmem:[%s343 + $0x10] sm:$0xff] %v2369
        %2378 = vst [vmem:[%s343 + $0x18] sm:$0xff] %v2370
        %2379 = vst [vmem:[%s343 + $0x20] sm:$0xff] %v2371
        %2380 = vst [vmem:[%s343 + $0x28] sm:$0xff] %v2372
        %2381 = vst [vmem:[%s343 + $0x30] sm:$0xff] %v2373
        %2382 = vst [vmem:[%s343 + $0x38] sm:$0xff] %v2374
        %s2383 = sand.u32 %s218, 1
        %s2384 = scalar_lea.sflag [#allocation4], %s2383
        %s2385 = sand.u32 %s218, 1
        %s2386 = smul.addr %s2385, 64
        %s2387 = scalar_lea.vmem [#allocation3], %s2386
        // Predicated region
        $region53: #{basic_block_forward.1} parent=51 // pred_check
          %p2388 = pneg %p228
        $region54: #{basic_block_forward.1} parent=51 // pred_check_branch
          %2390 = sbr.rel (%p2388) target = $region56
        $region55: #{basic_block_forward.1} parent=51 // pred_region
          %s2392 = ssub.s32 1024, 1024
          %2393 = vsyncadd %s2384, %s2392
          %s2394 = smul.addr %s22, 8
          %s2395 = smul.addr %s2394, 128
          %s2396 = scalar_lea.hbm %s8, %s2395
          %s2397 = sshll.u32 %s2387, 4
          %s2398 = int_to_ptr.vmem [resolvable:$true] %s2397
          %2403 = dma.vmem_to_hbm [thread:$0]  %s2398, 1024, %s2396, %s2384, 128, 128, 8
        $region56: #{basic_block_forward.1} parent=51 // pred_fallthru
          _
      $region52: #{basic_block_forward.1} parent=5 // pred_fallthru
        _
      %p2404 = scmp.le.s32.totalorder 2, %s17
      // Predicated region
      $region57: #{basic_block_forward.1} parent=5 // pred_check
        %p2405 = pneg %p2404
      $region58: #{basic_block_forward.1} parent=5 // pred_check_branch
        %2407 = sbr.rel (%p2405) target = $region60
      $region59: #{basic_block_forward.1} parent=5 // pred_region
        %s2408 = ssub.s32 %s17, 2
        // Predicated region
        $region61: #{basic_block_forward.1} parent=59 // pred_check
          %p2409 = pneg %p234
        $region62: #{basic_block_forward.1} parent=59 // pred_check_branch
          %2411 = sbr.rel (%p2409) target = $region64
        $region63: #{basic_block_forward.1} parent=59 // pred_region
          %s2412 = sand.u32 %s219, 1
          %s2413 = scalar_lea.sflag [#allocation4], %s2412
          %s2414 = sand.u32 %s219, 1
          %s2415 = smul.addr %s2414, 64
          %s2416 = scalar_lea.vmem [#allocation3], %s2415
          %2417 = dma.done %s2413, 1024
        $region64: #{basic_block_forward.1} parent=59 // pred_fallthru
          _
      $region60: #{basic_block_forward.1} parent=5 // pred_fallthru
        _
    $region6: #{basic_block_forward.1} parent=1 // loop_footer
      %s21 = sadd.s32 1, %s17
    $region7: #{basic_block_forward.1} parent=1 // loop_footer_branch
      %16 = sbr.rel target = $region3
    $region8: #{basic_block_forward.1} parent=1 // loop_exit
      _
    %2418 = vsyncpa [#allocation4], 1
    %s2419 = scalar_lea.sflag [#allocation4], 1
    %2420 = vsyncpa %s2419, 1

</llo_original>
